<compile_context>
chip_gen: v6e
topology: v6e:2x2x1
jax: 0.10.0
libtpu: 0.0.40
codegen_flags: <defaults>
</compile_context>

<pallas_src>
import jax
import jax.numpy as jnp
from jax.experimental import pallas as pl
from jax.experimental.pallas import tpu as pltpu

NN_SIZE = 512
CONFIDENCE_SIZE = 32
_LANE = 128


def _round_up(x, m):
    return ((x + m - 1) // m) * m


def _make_kernel(nn_size):
    def kernel(o_ref, w_in_ref, b_in_ref, w_h_ref, b_h_ref,
               w_conf_ref, b_conf_ref, rl_ref, small_ref, conf_ref):
        # Fused input projection: [fc1 | fc_c | fc_c_fix] in one MXU pass.
        o = o_ref[...].astype(jnp.bfloat16)                    # (tb, in_dim)
        hin = jnp.dot(o, w_in_ref[...],
                      preferred_element_type=jnp.float32) + b_in_ref[...]

        h_l = hin[:, 0:nn_size]                                # pre-ReLU fc1
        rl_ref[...] = h_l.astype(rl_ref.dtype)

        h = jnp.maximum(h_l, 0.0).astype(jnp.bfloat16)         # (tb, 512)
        h_conf = jnp.maximum(hin[:, nn_size:], 0.0).astype(jnp.bfloat16)  # (tb, 1024)

        # One matmul produces the lane-dense [p | v | a | q | 0...] block
        # directly (q is linear in h, folded into the packed weight).
        small_ref[...] = (
            jnp.dot(h, w_h_ref[...], preferred_element_type=jnp.float32)
            + b_h_ref[...]).astype(small_ref.dtype)

        # Block-diagonal conf weight -> [c | c_fix | 0...] in one matmul.
        conf_ref[...] = (
            jnp.dot(h_conf, w_conf_ref[...], preferred_element_type=jnp.float32)
            + b_conf_ref[...]).astype(conf_ref.dtype)

    return kernel


def r4dpvqc_forward(params, o, *, action_num, tile_b_max=512):
    """o: (B, input_dim) float32 observation (== x['o'] in the torch module)."""
    o = jnp.asarray(o, jnp.float32)
    B, input_dim = o.shape
    nn_size = params["fc1_w"].shape[1]
    conf_w = action_num * CONFIDENCE_SIZE
    A = action_num

    # ---- fuse / pack weights once (plain JAX, outside the kernel) ----------
    # Input projection: [fc1 | fc_c | fc_c_fix]  -> (input_dim, 3*nn_size)
    w_in = jnp.concatenate(
        [params["fc1_w"], params["fc_c_w"], params["fc_c_fix_w"]], axis=1)
    b_in = jnp.concatenate(
        [params["fc1_b"], params["fc_c_b"], params["fc_c_fix_b"]])[None, :]

    # Small heads packed as [p | v | a | q] (q pre-fused linearly), lane-padded.
    w_a = params["head_a_w"]                       # (nn, A)
    w_b = params["head_b_w"]                       # (nn, 1)
    w_q = w_b + w_a - jnp.sum(w_a, axis=1, keepdims=True)            # (nn, A)
    b_q = params["head_b_b"] + params["head_a_b"] - jnp.sum(params["head_a_b"])

    small_w = _round_up(3 * A + 1, _LANE)
    w_h = jnp.zeros((nn_size, small_w), jnp.float32)
    b_h = jnp.zeros((1, small_w), jnp.float32)
    w_h = w_h.at[:, 0:A].set(params["head_p_w"])
    w_h = w_h.at[:, A:A + 1].set(params["head_v_w"])
    w_h = w_h.at[:, A + 1:2 * A + 1].set(w_a)
    w_h = w_h.at[:, 2 * A + 1:3 * A + 1].set(w_q)
    b_h = b_h.at[0, 0:A].set(params["head_p_b"])
    b_h = b_h.at[0, A:A + 1].set(params["head_v_b"])
    b_h = b_h.at[0, A + 1:2 * A + 1].set(params["head_a_b"])
    b_h = b_h.at[0, 2 * A + 1:3 * A + 1].set(b_q)

    # Confidence heads block-diagonal: rows 0:nn -> cols 0:conf_w = head_c,
    # rows nn:2nn -> cols conf_w:2*conf_w = head_c_fix.
    conf_pack_w = _round_up(2 * conf_w, _LANE)
    w_conf = jnp.zeros((2 * nn_size, conf_pack_w), jnp.float32)
    b_conf = jnp.zeros((1, conf_pack_w), jnp.float32)
    w_conf = w_conf.at[0:nn_size, 0:conf_w].set(params["head_c_w"])
    w_conf = w_conf.at[nn_size:, conf_w:2 * conf_w].set(params["head_c_fix_w"])
    b_conf = b_conf.at[0, 0:conf_w].set(params["head_c_b"])
    b_conf = b_conf.at[0, conf_w:2 * conf_w].set(params["head_c_fix_b"])

    # bf16 weights for the MXU (f32 accumulation inside the kernel).
    w_in = w_in.astype(jnp.bfloat16)
    w_h = w_h.astype(jnp.bfloat16)
    w_conf = w_conf.astype(jnp.bfloat16)

    # ---- batch tiling: pad B, tile rows, "parallel" grid axis --------------
    b8 = _round_up(max(B, 1), 8)
    n_tiles = pl.cdiv(b8, tile_b_max)
    tile_b = _round_up(pl.cdiv(b8, n_tiles), 8)    # minimise round-up waste
    b_pad = n_tiles * tile_b
    o_p = o if b_pad == B else jnp.zeros((b_pad, input_dim),
                                         jnp.float32).at[:B].set(o)
    grid = (n_tiles,)

    kernel = _make_kernel(nn_size)

    rl, small, conf = pl.pallas_call(
        kernel,
        out_shape=(
            jax.ShapeDtypeStruct((b_pad, nn_size), jnp.float32),
            jax.ShapeDtypeStruct((b_pad, small_w), jnp.float32),
            jax.ShapeDtypeStruct((b_pad, conf_pack_w), jnp.float32),
        ),
        grid_spec=pltpu.PrefetchScalarGridSpec(
            num_scalar_prefetch=0,
            grid=grid,
            in_specs=[
                pl.BlockSpec((tile_b, input_dim), lambda i: (i, 0)),
                pl.BlockSpec((input_dim, 3 * nn_size), lambda i: (0, 0)),
                pl.BlockSpec((1, 3 * nn_size), lambda i: (0, 0)),
                pl.BlockSpec((nn_size, small_w), lambda i: (0, 0)),
                pl.BlockSpec((1, small_w), lambda i: (0, 0)),
                pl.BlockSpec((2 * nn_size, conf_pack_w), lambda i: (0, 0)),
                pl.BlockSpec((1, conf_pack_w), lambda i: (0, 0)),
            ],
            out_specs=[
                pl.BlockSpec((tile_b, nn_size), lambda i: (i, 0)),
                pl.BlockSpec((tile_b, small_w), lambda i: (i, 0)),
                pl.BlockSpec((tile_b, conf_pack_w), lambda i: (i, 0)),
            ],
        ),
        compiler_params=pltpu.CompilerParams(
            dimension_semantics=("parallel",)),
    )(o_p, w_in, b_in, w_h, b_h, w_conf, b_conf)

    return {
        "policy": small[:B, 0:A],
        "value": small[:B, A:A + 1],
        "advantage_for_q": small[:B, A + 1:2 * A + 1],
        "qvalue": small[:B, 2 * A + 1:3 * A + 1],
        "rl_latent": rl[:B],
        "confidence_57": conf[:B, 0:conf_w],
        "confidence_57_fix": conf[:B, conf_w:2 * conf_w],
    }


# ---------------------------------------------------------------------------
# Deterministic parameter init (nn.Linear-style U(-1/sqrt(fan_in), +)) and a
# plain-JAX reference for correctness checking.
# ---------------------------------------------------------------------------
def init_params(key, input_dim, action_num,
                nn_size=NN_SIZE, confidence_size=CONFIDENCE_SIZE):
    conf_w = action_num * confidence_size
    layer_dims = {
        "fc1": (input_dim, nn_size),
        "head_p": (nn_size, action_num),
        "head_v": (nn_size, 1),
        "head_a": (nn_size, action_num),
        "head_b": (nn_size, 1),
        "fc_c": (input_dim, nn_size),
        "head_c": (nn_size, conf_w),
        "fc_c_fix": (input_dim, nn_size),
        "head_c_fix": (nn_size, conf_w),
    }
    params = {}
    for name, (fan_in, fan_out) in layer_dims.items():
        key, kw, kb = jax.random.split(key, 3)
        bound = float(fan_in) ** -0.5
        params[name + "_w"] = jax.random.uniform(
            kw, (fan_in, fan_out), jnp.float32, -bound, bound)
        params[name + "_b"] = jax.random.uniform(
            kb, (fan_out,), jnp.float32, -bound, bound)
    return params


def ref_forward(params, o):
    h_l = o @ params["fc1_w"] + params["fc1_b"]
    h = jnp.maximum(h_l, 0.0)
    p = h @ params["head_p_w"] + params["head_p_b"]
    v = h @ params["head_v_w"] + params["head_v_b"]
    a = h @ params["head_a_w"] + params["head_a_b"]
    b = h @ params["head_b_w"] + params["head_b_b"]
    q = b + a - jnp.sum(a, axis=-1, keepdims=True)
    h_c = jnp.maximum(o @ params["fc_c_w"] + params["fc_c_b"], 0.0)
    c = h_c @ params["head_c_w"] + params["head_c_b"]
    h_cf = jnp.maximum(o @ params["fc_c_fix_w"] + params["fc_c_fix_b"], 0.0)
    c_fix = h_cf @ params["head_c_fix_w"] + params["head_c_fix_b"]
    return {
        "policy": p, "value": v, "advantage_for_q": a, "qvalue": q,
        "rl_latent": h_l, "confidence_57": c, "confidence_57_fix": c_fix,
    }


if __name__ == "__main__":
    key = jax.random.PRNGKey(0)
    k_params, k_obs = jax.random.split(key)

    B, INPUT_DIM, ACTION_NUM = 2, 4, 2   # cart-pole: 4-d obs, 2 actions
    params = init_params(k_params, INPUT_DIM, ACTION_NUM)
    o = jax.random.normal(k_obs, (B, INPUT_DIM), dtype=jnp.float32)

    out = r4dpvqc_forward(params, o, action_num=ACTION_NUM)
    jax.block_until_ready(out)

    ref = ref_forward(params, o)
    for name in ref:
        assert out[name].shape == ref[name].shape, (
            name, out[name].shape, ref[name].shape)
        err = float(jnp.max(jnp.abs(out[name] - ref[name])))
        assert jnp.allclose(out[name], ref[name], atol=2e-2, rtol=2e-2), (
            name, err)

    print("KERNEL_OK")
</pallas_src>

<mosaic_0001>
module attributes {stable_mosaic.version = 11 : i64} {
  func.func @kernel(%arg0: i32, %arg1: memref<8x4xf32, #tpu.memory_space<vmem>>, %arg2: memref<4x1536xbf16, #tpu.memory_space<vmem>>, %arg3: memref<1x1536xf32, #tpu.memory_space<vmem>>, %arg4: memref<512x128xbf16, #tpu.memory_space<vmem>>, %arg5: memref<1x128xf32, #tpu.memory_space<vmem>>, %arg6: memref<1024x128xbf16, #tpu.memory_space<vmem>>, %arg7: memref<1x128xf32, #tpu.memory_space<vmem>>, %arg8: memref<8x512xf32, #tpu.memory_space<vmem>>, %arg9: memref<8x128xf32, #tpu.memory_space<vmem>>, %arg10: memref<8x128xf32, #tpu.memory_space<vmem>>) attributes {dimension_semantics = [#tpu.dimension_semantics<parallel>], iteration_bounds = array<i64: 1>, scalar_prefetch = 0 : i64, scratch_operands = 0 : i64, tpu.core_type = #tpu.core_type<tc>, window_params = [{transform_indices = @transform_0, window_bounds = array<i64: 8, 4>}, {pipeline_mode = #tpu.pipeline_mode<synchronous>, transform_indices = @transform_1, window_bounds = array<i64: 4, 1536>}, {pipeline_mode = #tpu.pipeline_mode<synchronous>, transform_indices = @transform_2, window_bounds = array<i64: 1, 1536>}, {pipeline_mode = #tpu.pipeline_mode<synchronous>, transform_indices = @transform_3, window_bounds = array<i64: 512, 128>}, {pipeline_mode = #tpu.pipeline_mode<synchronous>, transform_indices = @transform_4, window_bounds = array<i64: 1, 128>}, {pipeline_mode = #tpu.pipeline_mode<synchronous>, transform_indices = @transform_5, window_bounds = array<i64: 1024, 128>}, {pipeline_mode = #tpu.pipeline_mode<synchronous>, transform_indices = @transform_6, window_bounds = array<i64: 1, 128>}, {transform_indices = @transform_7, window_bounds = array<i64: 8, 512>}, {transform_indices = @transform_8, window_bounds = array<i64: 8, 128>}, {transform_indices = @transform_9, window_bounds = array<i64: 8, 128>}]} {
    %c0 = arith.constant 0 : index
    %c0_0 = arith.constant 0 : index
    %0 = vector.load %arg1[%c0, %c0_0] : memref<8x4xf32, #tpu.memory_space<vmem>>, vector<8x4xf32>
    %1 = arith.truncf %0 : vector<8x4xf32> to vector<8x4xbf16>
    %c0_1 = arith.constant 0 : index
    %c0_2 = arith.constant 0 : index
    %2 = vector.load %arg2[%c0_1, %c0_2] : memref<4x1536xbf16, #tpu.memory_space<vmem>>, vector<4x1536xbf16>
    %cst = arith.constant dense<0.000000e+00> : vector<8x1536xf32>
    %3 = tpu.matmul %1, %2, %cst {dimension_numbers = #tpu.dot_dimension_numbers<[1], [0], [0], [1], [0, 0, 1, 1], [], []>} : vector<8x4xbf16>, vector<4x1536xbf16>, vector<8x1536xf32> -> vector<8x1536xf32>
    %c0_3 = arith.constant 0 : index
    %c0_4 = arith.constant 0 : index
    %4 = vector.load %arg3[%c0_3, %c0_4] : memref<1x1536xf32, #tpu.memory_space<vmem>>, vector<1x1536xf32>
    %5 = vector.broadcast %4 : vector<1x1536xf32> to vector<8x1536xf32>
    %6 = arith.addf %3, %5 : vector<8x1536xf32>
    %7 = vector.extract_strided_slice %6 {offsets = [0, 0], sizes = [8, 512], strides = [1, 1]} : vector<8x1536xf32> to vector<8x512xf32>
    %c0_5 = arith.constant 0 : index
    %c0_6 = arith.constant 0 : index
    %8 = vector.load %arg8[%c0_5, %c0_6] : memref<8x512xf32, #tpu.memory_space<vmem>>, vector<8x512xf32>
    tpu.vector_store %arg8[%c0_5, %c0_6], %7 {strides = array<i32>} : memref<8x512xf32, #tpu.memory_space<vmem>>, vector<8x512xf32>,
    %cst_7 = arith.constant 0.000000e+00 : f32
    %9 = vector.broadcast %cst_7 : f32 to vector<8x512xf32>
    %10 = arith.maximumf %7, %9 : vector<8x512xf32>
    %11 = arith.truncf %10 : vector<8x512xf32> to vector<8x512xbf16>
    %12 = vector.extract_strided_slice %6 {offsets = [0, 512], sizes = [8, 1024], strides = [1, 1]} : vector<8x1536xf32> to vector<8x1024xf32>
    %cst_8 = arith.constant 0.000000e+00 : f32
    %13 = vector.broadcast %cst_8 : f32 to vector<8x1024xf32>
    %14 = arith.maximumf %12, %13 : vector<8x1024xf32>
    %15 = arith.truncf %14 : vector<8x1024xf32> to vector<8x1024xbf16>
    %c0_9 = arith.constant 0 : index
    %c0_10 = arith.constant 0 : index
    %16 = vector.load %arg4[%c0_9, %c0_10] : memref<512x128xbf16, #tpu.memory_space<vmem>>, vector<512x128xbf16>
    %cst_11 = arith.constant dense<0.000000e+00> : vector<8x128xf32>
    %17 = tpu.matmul %11, %16, %cst_11 {dimension_numbers = #tpu.dot_dimension_numbers<[1], [0], [0], [1], [0, 0, 1, 1], [], []>} : vector<8x512xbf16>, vector<512x128xbf16>, vector<8x128xf32> -> vector<8x128xf32>
    %c0_12 = arith.constant 0 : index
    %c0_13 = arith.constant 0 : index
    %18 = vector.load %arg5[%c0_12, %c0_13] : memref<1x128xf32, #tpu.memory_space<vmem>>, vector<1x128xf32>
    %19 = vector.broadcast %18 : vector<1x128xf32> to vector<8x128xf32>
    %20 = arith.addf %17, %19 : vector<8x128xf32>
    %c0_14 = arith.constant 0 : index
    %c0_15 = arith.constant 0 : index
    %21 = vector.load %arg9[%c0_14, %c0_15] : memref<8x128xf32, #tpu.memory_space<vmem>>, vector<8x128xf32>
    tpu.vector_store %arg9[%c0_14, %c0_15], %20 {strides = array<i32>} : memref<8x128xf32, #tpu.memory_space<vmem>>, vector<8x128xf32>,
    %c0_16 = arith.constant 0 : index
    %c0_17 = arith.constant 0 : index
    %22 = vector.load %arg6[%c0_16, %c0_17] : memref<1024x128xbf16, #tpu.memory_space<vmem>>, vector<1024x128xbf16>
    %cst_18 = arith.constant dense<0.000000e+00> : vector<8x128xf32>
    %23 = tpu.matmul %15, %22, %cst_18 {dimension_numbers = #tpu.dot_dimension_numbers<[1], [0], [0], [1], [0, 0, 1, 1], [], []>} : vector<8x1024xbf16>, vector<1024x128xbf16>, vector<8x128xf32> -> vector<8x128xf32>
    %c0_19 = arith.constant 0 : index
    %c0_20 = arith.constant 0 : index
    %24 = vector.load %arg7[%c0_19, %c0_20] : memref<1x128xf32, #tpu.memory_space<vmem>>, vector<1x128xf32>
    %25 = vector.broadcast %24 : vector<1x128xf32> to vector<8x128xf32>
    %26 = arith.addf %23, %25 : vector<8x128xf32>
    %c0_21 = arith.constant 0 : index
    %c0_22 = arith.constant 0 : index
    %27 = vector.load %arg10[%c0_21, %c0_22] : memref<8x128xf32, #tpu.memory_space<vmem>>, vector<8x128xf32>
    tpu.vector_store %arg10[%c0_21, %c0_22], %26 {strides = array<i32>} : memref<8x128xf32, #tpu.memory_space<vmem>>, vector<8x128xf32>,
    return
  }
  func.func @transform_0(%arg0: i32) -> (i32, i32) {
    %c0_i32 = arith.constant 0 : i32
    %c0_i32_0 = arith.constant 0 : i32
    return %arg0, %c0_i32 : i32, i32
  }
  func.func @transform_1(%arg0: i32) -> (i32, i32) {
    %c0_i32 = arith.constant 0 : i32
    %c0_i32_0 = arith.constant 0 : i32
    %c0_i32_1 = arith.constant 0 : i32
    return %c0_i32, %c0_i32_0 : i32, i32
  }
  func.func @transform_2(%arg0: i32) -> (i32, i32) {
    %c0_i32 = arith.constant 0 : i32
    %c0_i32_0 = arith.constant 0 : i32
    %c0_i32_1 = arith.constant 0 : i32
    return %c0_i32, %c0_i32_0 : i32, i32
  }
  func.func @transform_3(%arg0: i32) -> (i32, i32) {
    %c0_i32 = arith.constant 0 : i32
    %c0_i32_0 = arith.constant 0 : i32
    %c0_i32_1 = arith.constant 0 : i32
    return %c0_i32, %c0_i32_0 : i32, i32
  }
  func.func @transform_4(%arg0: i32) -> (i32, i32) {
    %c0_i32 = arith.constant 0 : i32
    %c0_i32_0 = arith.constant 0 : i32
    %c0_i32_1 = arith.constant 0 : i32
    return %c0_i32, %c0_i32_0 : i32, i32
  }
  func.func @transform_5(%arg0: i32) -> (i32, i32) {
    %c0_i32 = arith.constant 0 : i32
    %c0_i32_0 = arith.constant 0 : i32
    %c0_i32_1 = arith.constant 0 : i32
    return %c0_i32, %c0_i32_0 : i32, i32
  }
  func.func @transform_6(%arg0: i32) -> (i32, i32) {
    %c0_i32 = arith.constant 0 : i32
    %c0_i32_0 = arith.constant 0 : i32
    %c0_i32_1 = arith.constant 0 : i32
    return %c0_i32, %c0_i32_0 : i32, i32
  }
  func.func @transform_7(%arg0: i32) -> (i32, i32) {
    %c0_i32 = arith.constant 0 : i32
    %c0_i32_0 = arith.constant 0 : i32
    return %arg0, %c0_i32 : i32, i32
  }
  func.func @transform_8(%arg0: i32) -> (i32, i32) {
    %c0_i32 = arith.constant 0 : i32
    %c0_i32_0 = arith.constant 0 : i32
    return %arg0, %c0_i32 : i32, i32
  }
  func.func @transform_9(%arg0: i32) -> (i32, i32) {
    %c0_i32 = arith.constant 0 : i32
    %c0_i32_0 = arith.constant 0 : i32
    return %arg0, %c0_i32 : i32, i32
  }
}

</mosaic_0001>

<llo_original>
// kernel: tpu_custom_call.1
$region0: #{tpu_custom_call.1}
  #allocation0 [shape = 'u32[]', space=smem, size = 0x4, offset = 0x4, fixed_abs, tag = 'smem constant byte address 0x4 - core index']
  #allocation1 [shape = 'u32[144,128]{1,0:T(1,128)}', space=vmem, size = 0x12000, scoped, tag = 'internal scratch']
  %s0 = inlined_call_operand.vmem [shape: f32[8,4], index: 0, kind: input, shape index: {}]
  %s1 = inlined_call_operand.hbm [shape: bf16[4,1536], index: 1, kind: input, shape index: {}]
  %s2 = inlined_call_operand.vmem [shape: f32[1,1536], index: 2, kind: input, shape index: {}]
  %s3 = inlined_call_operand.hbm [shape: bf16[512,128], index: 3, kind: input, shape index: {}]
  %s4 = inlined_call_operand.vmem [shape: f32[1,128], index: 4, kind: input, shape index: {}]
  %s5 = inlined_call_operand.hbm [shape: bf16[1024,128], index: 5, kind: input, shape index: {}]
  %s6 = inlined_call_operand.vmem [shape: f32[1,128], index: 6, kind: input, shape index: {}]
  %s7 = inlined_call_operand.hbm [shape: f32[8,512], index: 7, kind: output, shape index: {0}]
  %s8 = inlined_call_operand.hbm [shape: f32[8,128], index: 8, kind: output, shape index: {1}]
  %s9 = inlined_call_operand.hbm [shape: f32[8,128], index: 9, kind: output, shape index: {2}]
  %10 = xla_tuple %s7, %s8, %s9
  %s11 = sld [smem:[#allocation0]]
  $region66: #{tpu_custom_call.1} parent=0
    _
  %s13 = ssub.s32 1, %s11
  %s14 = scalar_select 0, %s13, %s11
  $region1: #{tpu_custom_call.1} parent=0
    #allocation2 [shape = 'u8[12288]{0}', space=vmem, size = 0x3000, scoped, tag = 'input window, operand 1, single buffered']
    #allocation3 [shape = 's32[1]{0}', space=sflag, size = 0x4, scoped, tag = 'scoped memory for tpu_custom_call.1']
    #allocation4 [shape = 's32[1]{0}', space=sflag, size = 0x4, scoped, tag = 'scoped memory for tpu_custom_call.1']
    #allocation5 [shape = 'u8[131072]{0}', space=vmem, size = 0x20000, scoped, tag = 'input window, operand 3, single buffered']
    #allocation6 [shape = 's32[1]{0}', space=sflag, size = 0x4, scoped, tag = 'scoped memory for tpu_custom_call.1']
    #allocation7 [shape = 'u8[262144]{0}', space=vmem, size = 0x40000, scoped, tag = 'input window, operand 5, single buffered']
    #allocation8 [shape = 'u8[16384]{0}', space=vmem, size = 0x4000, scoped, tag = 'output window, operand 0, single buffered']
    #allocation9 [shape = 'u8[4096]{0}', space=vmem, size = 0x1000, scoped, tag = 'output window, operand 1, single buffered']
    #allocation10 [shape = 's32[1]{0}', space=sflag, size = 0x4, scoped, tag = 'scoped memory for tpu_custom_call.1']
    #allocation11 [shape = 'u8[4096]{0}', space=vmem, size = 0x1000, scoped, tag = 'output window, operand 2, single buffered']
    %15 = vsyncpa [#allocation3], 0
    %16 = vsyncpa [#allocation6], 0
    %17 = vsyncpa [#allocation4], 0
    %18 = vsyncpa [#allocation10], 0
    // Predicated region
    $region2: #{tpu_custom_call.1} parent=1 // pred_check
      _
    $region3: #{tpu_custom_call.1} parent=1 // pred_check_branch
      %20 = sbr.rel (0) target = $region5
    $region4: #{tpu_custom_call.1} parent=1 // pred_region
      _
    $region5: #{tpu_custom_call.1} parent=1 // pred_fallthru
      _
    // Predicated region
    $region6: #{tpu_custom_call.1} parent=1 // pred_check
      _
    $region7: #{tpu_custom_call.1} parent=1 // pred_check_branch
      %22 = sbr.rel (0) target = $region9
    $region8: #{tpu_custom_call.1} parent=1 // pred_region
      %s24 = ssub.s32 384, 384
      %25 = vsyncadd [#allocation3], %s24
      %s27 = sshll.u32 [#allocation2], 4
      %s28 = int_to_ptr.vmem [resolvable:$true] %s27
      %30 = dma.hbm_to_vmem [thread:$0]  %s1, 384, %s28, [#allocation3]
    $region9: #{tpu_custom_call.1} parent=1 // pred_fallthru
      _
    // Predicated region
    $region10: #{tpu_custom_call.1} parent=1 // pred_check
      _
    $region11: #{tpu_custom_call.1} parent=1 // pred_check_branch
      %32 = sbr.rel (0) target = $region13
    $region12: #{tpu_custom_call.1} parent=1 // pred_region
      _
    $region13: #{tpu_custom_call.1} parent=1 // pred_fallthru
      _
    // Predicated region
    $region14: #{tpu_custom_call.1} parent=1 // pred_check
      _
    $region15: #{tpu_custom_call.1} parent=1 // pred_check_branch
      %34 = sbr.rel (0) target = $region17
    $region16: #{tpu_custom_call.1} parent=1 // pred_region
      %s36 = ssub.s32 4096, 4096
      %37 = vsyncadd [#allocation6], %s36
      %s38 = sshll.u32 [#allocation5], 4
      %s39 = int_to_ptr.vmem [resolvable:$true] %s38
      %44 = dma.hbm_to_vmem [thread:$0]  %s3, 4096, %s39, [#allocation6], 64, 64, 4
    $region17: #{tpu_custom_call.1} parent=1 // pred_fallthru
      _
    // Predicated region
    $region18: #{tpu_custom_call.1} parent=1 // pred_check
      _
    $region19: #{tpu_custom_call.1} parent=1 // pred_check_branch
      %46 = sbr.rel (0) target = $region21
    $region20: #{tpu_custom_call.1} parent=1 // pred_region
      _
    $region21: #{tpu_custom_call.1} parent=1 // pred_fallthru
      _
    // Predicated region
    $region22: #{tpu_custom_call.1} parent=1 // pred_check
      _
    $region23: #{tpu_custom_call.1} parent=1 // pred_check_branch
      %48 = sbr.rel (0) target = $region25
    $region24: #{tpu_custom_call.1} parent=1 // pred_region
      %s50 = ssub.s32 8192, 8192
      %51 = vsyncadd [#allocation6], %s50
      %s52 = sshll.u32 [#allocation7], 4
      %s53 = int_to_ptr.vmem [resolvable:$true] %s52
      %58 = dma.hbm_to_vmem [thread:$0]  %s5, 8192, %s53, [#allocation6], 64, 64, 4
    $region25: #{tpu_custom_call.1} parent=1 // pred_fallthru
      _
    // Predicated region
    $region26: #{tpu_custom_call.1} parent=1 // pred_check
      _
    $region27: #{tpu_custom_call.1} parent=1 // pred_check_branch
      %60 = sbr.rel (0) target = $region29
    $region28: #{tpu_custom_call.1} parent=1 // pred_region
      _
    $region29: #{tpu_custom_call.1} parent=1 // pred_fallthru
      _
    // Predicated region
    $region30: #{tpu_custom_call.1} parent=1 // pred_check
      _
    $region31: #{tpu_custom_call.1} parent=1 // pred_check_branch
      %62 = sbr.rel (0) target = $region33
    $region32: #{tpu_custom_call.1} parent=1 // pred_region
      %63 = dma.done [#allocation3], 384
    $region33: #{tpu_custom_call.1} parent=1 // pred_fallthru
      _
    // Predicated region
    $region34: #{tpu_custom_call.1} parent=1 // pred_check
      _
    $region35: #{tpu_custom_call.1} parent=1 // pred_check_branch
      %65 = sbr.rel (0) target = $region37
    $region36: #{tpu_custom_call.1} parent=1 // pred_region
      %66 = dma.done [#allocation6], 4096
    $region37: #{tpu_custom_call.1} parent=1 // pred_fallthru
      _
    // Predicated region
    $region38: #{tpu_custom_call.1} parent=1 // pred_check
      _
    $region39: #{tpu_custom_call.1} parent=1 // pred_check_branch
      %68 = sbr.rel (0) target = $region41
    $region40: #{tpu_custom_call.1} parent=1 // pred_region
      %69 = dma.done [#allocation6], 8192
    $region41: #{tpu_custom_call.1} parent=1 // pred_fallthru
      _
    %v71 = vld [vmem:[%s0] sm:$0xff]
    %v72 = vpack.c.bf16 %v71, %v71
    %v73 = vld [vmem:[#allocation2] sm:$0xff]
    %v74 = vld [vmem:[#allocation2 + $0x8] sm:$0xff]
    %v75 = vld [vmem:[#allocation2 + $0x10] sm:$0xff]
    %v76 = vld [vmem:[%s2] sm:$0xff]
    %v77 = vld [vmem:[%s2 + $0x8] sm:$0xf]
    %v80 = vlaneseq
    %v81 = vshrl.u32 %v80, 7
    %v82 = vsub.s32 0, %v81
    %v83 = vrot.slane %v76, %v82
    %v84 = vlaneseq
    %v85 = vshrl.u32 %v84, 7
    %v86 = vsub.s32 1, %v85
    %v87 = vrot.slane %v76, %v86
    %v88 = vlaneseq
    %v89 = vshrl.u32 %v88, 7
    %v90 = vsub.s32 2, %v89
    %v91 = vrot.slane %v76, %v90
    %v92 = vlaneseq
    %v93 = vshrl.u32 %v92, 7
    %v94 = vsub.s32 3, %v93
    %v95 = vrot.slane %v76, %v94
    %v96 = vlaneseq
    %v97 = vshrl.u32 %v96, 7
    %v98 = vsub.s32 4, %v97
    %v99 = vrot.slane %v76, %v98
    %v100 = vlaneseq
    %v101 = vshrl.u32 %v100, 7
    %v102 = vsub.s32 5, %v101
    %v103 = vrot.slane %v76, %v102
    %v104 = vlaneseq
    %v105 = vshrl.u32 %v104, 7
    %v106 = vsub.s32 6, %v105
    %v107 = vrot.slane %v76, %v106
    %v108 = vlaneseq
    %v109 = vshrl.u32 %v108, 7
    %v110 = vsub.s32 7, %v109
    %v111 = vrot.slane %v76, %v110
    %v112 = vlaneseq
    %v113 = vshrl.u32 %v112, 7
    %v114 = vsub.s32 0, %v113
    %v115 = vrot.slane %v77, %v114
    %v116 = vlaneseq
    %v117 = vshrl.u32 %v116, 7
    %v118 = vsub.s32 1, %v117
    %v119 = vrot.slane %v77, %v118
    %v120 = vlaneseq
    %v121 = vshrl.u32 %v120, 7
    %v122 = vsub.s32 2, %v121
    %v123 = vrot.slane %v77, %v122
    %v124 = vlaneseq
    %v125 = vshrl.u32 %v124, 7
    %v126 = vsub.s32 3, %v125
    %v127 = vrot.slane %v77, %v126
    %v143 = vcombine.high %v73, %v73
    %v145 = vunpack.c.l.s4 1983009808
    %v146 = vunpack.c.0.s8 %v145
    %v147 = vlaneseq
    %v148 = vshrl.u32 %v147, 7
    %v149 = vsub.s32 %v146, %v148
    %v150 = vrot.slane %v73, %v149
    %v152 = vunpack.c.l.s4 1983009808
    %v153 = vunpack.c.0.s8 %v152
    %v154 = vlaneseq
    %v155 = vshrl.u32 %v154, 7
    %v156 = vsub.s32 %v153, %v155
    %v157 = vrot.slane %v143, %v156
    %v158 = vcombine.high %v150, %v150
    %v159 = vcombine.high %v157, %v157
    %v160 = vcombine.high %v74, %v74
    %v162 = vunpack.c.l.s4 1983009808
    %v163 = vunpack.c.0.s8 %v162
    %v164 = vlaneseq
    %v165 = vshrl.u32 %v164, 7
    %v166 = vsub.s32 %v163, %v165
    %v167 = vrot.slane %v74, %v166
    %v169 = vunpack.c.l.s4 1983009808
    %v170 = vunpack.c.0.s8 %v169
    %v171 = vlaneseq
    %v172 = vshrl.u32 %v171, 7
    %v173 = vsub.s32 %v170, %v172
    %v174 = vrot.slane %v160, %v173
    %v175 = vcombine.high %v167, %v167
    %v176 = vcombine.high %v174, %v174
    %v177 = vcombine.high %v75, %v75
    %v179 = vunpack.c.l.s4 1983009808
    %v180 = vunpack.c.0.s8 %v179
    %v181 = vlaneseq
    %v182 = vshrl.u32 %v181, 7
    %v183 = vsub.s32 %v180, %v182
    %v184 = vrot.slane %v75, %v183
    %v186 = vunpack.c.l.s4 1983009808
    %v187 = vunpack.c.0.s8 %v186
    %v188 = vlaneseq
    %v189 = vshrl.u32 %v188, 7
    %v190 = vsub.s32 %v187, %v189
    %v191 = vrot.slane %v177, %v190
    %v192 = vcombine.high %v184, %v184
    %v193 = vcombine.high %v191, %v191
    %vm194 = vcmask 31744
    %v196 = vsel %vm194, %v72, 0
    %vm198 = vcmask 1041408
    %v200 = vsel %vm198, %v150, 0
    %v203 = vsel %vm198, %v158, 0
    %v206 = vsel %vm198, %v157, 0
    %v209 = vsel %vm198, %v159, 0
    %v212 = vsel %vm198, %v167, 0
    %v215 = vsel %vm198, %v175, 0
    %v218 = vsel %vm198, %v174, 0
    %v221 = vsel %vm198, %v176, 0
    %v224 = vsel %vm198, %v184, 0
    %v227 = vsel %vm198, %v192, 0
    %v230 = vsel %vm198, %v191, 0
    %v233 = vsel %vm198, %v193, 0
    %235 = vmatprep.subr.bf16.mxu0 0
    %236 = vmatpush1.bf16.msra.mxu0 0
    %237 = vmatprep.subr.bf16.mxu0 0
    %238 = vmatpush1.bf16.msra.mxu0 0
    %239 = vmatprep.subr.bf16.mxu0 0
    %240 = vmatpush1.bf16.msra.mxu0 0
    %241 = vmatprep.subr.bf16.mxu0 0
    %242 = vmatpush1.bf16.msra.mxu0 0
    %243 = vmatprep.subr.bf16.mxu0 0
    %244 = vmatpush1.bf16.msra.mxu0 0
    %245 = vmatprep.subr.bf16.mxu0 0
    %246 = vmatpush1.bf16.msra.mxu0 0
    %247 = vmatprep.subr.bf16.mxu0 0
    %248 = vmatpush1.bf16.msra.mxu0 0
    %249 = vmatprep.subr.bf16.mxu0 %v203
    %250 = vmatpush1.bf16.msra.mxu0 %v200
    %251 = vmatprep.subr.bf16.mxu0 0
    %252 = vmatpush2.bf16.msra.mxu0 0
    %253 = vmatprep.subr.bf16.mxu0 0
    %254 = vmatpush2.bf16.msra.mxu0 0
    %255 = vmatprep.subr.bf16.mxu0 0
    %256 = vmatpush2.bf16.msra.mxu0 0
    %257 = vmatprep.subr.bf16.mxu0 0
    %258 = vmatpush2.bf16.msra.mxu0 0
    %259 = vmatprep.subr.bf16.mxu0 0
    %260 = vmatpush2.bf16.msra.mxu0 0
    %261 = vmatprep.subr.bf16.mxu0 0
    %262 = vmatpush2.bf16.msra.mxu0 0
    %263 = vmatprep.subr.bf16.mxu0 0
    %264 = vmatpush2.bf16.msra.mxu0 0
    %265 = vmatprep.subr.bf16.mxu0 0
    %266 = vmatpush2.bf16.msra.mxu0 0
    %267 = vmatprep.mubr.bf16.mxu0 0
    %268 = vmatmul.mubr.bf16.gmra.mxu0 %v196
    %v269 = vpop.f32.mrf.mxu0
    %v270 = vadd.f32 %v83, %v269
    %v271 = vpop.f32.mrf.mxu0
    %v272 = vadd.f32 %v87, %v271
    %v273 = vpop.f32.mrf.mxu0
    %v274 = vpop.f32.mrf.mxu0
    %275 = vdwg.mxu0
    %276 = vmatprep.subr.bf16.mxu0 0
    %277 = vmatpush1.bf16.msra.mxu0 0
    %278 = vmatprep.subr.bf16.mxu0 0
    %279 = vmatpush1.bf16.msra.mxu0 0
    %280 = vmatprep.subr.bf16.mxu0 0
    %281 = vmatpush1.bf16.msra.mxu0 0
    %282 = vmatprep.subr.bf16.mxu0 0
    %283 = vmatpush1.bf16.msra.mxu0 0
    %284 = vmatprep.subr.bf16.mxu0 0
    %285 = vmatpush1.bf16.msra.mxu0 0
    %286 = vmatprep.subr.bf16.mxu0 0
    %287 = vmatpush1.bf16.msra.mxu0 0
    %288 = vmatprep.subr.bf16.mxu0 0
    %289 = vmatpush1.bf16.msra.mxu0 0
    %290 = vmatprep.subr.bf16.mxu0 %v209
    %291 = vmatpush1.bf16.msra.mxu0 %v206
    %292 = vmatprep.subr.bf16.mxu0 0
    %293 = vmatpush2.bf16.msra.mxu0 0
    %294 = vmatprep.subr.bf16.mxu0 0
    %295 = vmatpush2.bf16.msra.mxu0 0
    %296 = vmatprep.subr.bf16.mxu0 0
    %297 = vmatpush2.bf16.msra.mxu0 0
    %298 = vmatprep.subr.bf16.mxu0 0
    %299 = vmatpush2.bf16.msra.mxu0 0
    %300 = vmatprep.subr.bf16.mxu0 0
    %301 = vmatpush2.bf16.msra.mxu0 0
    %302 = vmatprep.subr.bf16.mxu0 0
    %303 = vmatpush2.bf16.msra.mxu0 0
    %304 = vmatprep.subr.bf16.mxu0 0
    %305 = vmatpush2.bf16.msra.mxu0 0
    %306 = vmatprep.subr.bf16.mxu0 0
    %307 = vmatpush2.bf16.msra.mxu0 0
    %308 = vmatprep.mubr.bf16.mxu0 0
    %309 = vmatmul.mubr.bf16.gmra.mxu0 %v196
    %v310 = vpop.f32.mrf.mxu0
    %v311 = vadd.f32 %v91, %v310
    %v312 = vpop.f32.mrf.mxu0
    %v313 = vadd.f32 %v95, %v312
    %v314 = vpop.f32.mrf.mxu0
    %v315 = vpop.f32.mrf.mxu0
    %316 = vdwg.mxu0
    %317 = vmatprep.subr.bf16.mxu0 0
    %318 = vmatpush1.bf16.msra.mxu0 0
    %319 = vmatprep.subr.bf16.mxu0 0
    %320 = vmatpush1.bf16.msra.mxu0 0
    %321 = vmatprep.subr.bf16.mxu0 0
    %322 = vmatpush1.bf16.msra.mxu0 0
    %323 = vmatprep.subr.bf16.mxu0 0
    %324 = vmatpush1.bf16.msra.mxu0 0
    %325 = vmatprep.subr.bf16.mxu0 0
    %326 = vmatpush1.bf16.msra.mxu0 0
    %327 = vmatprep.subr.bf16.mxu0 0
    %328 = vmatpush1.bf16.msra.mxu0 0
    %329 = vmatprep.subr.bf16.mxu0 0
    %330 = vmatpush1.bf16.msra.mxu0 0
    %331 = vmatprep.subr.bf16.mxu0 %v215
    %332 = vmatpush1.bf16.msra.mxu0 %v212
    %333 = vmatprep.subr.bf16.mxu0 0
    %334 = vmatpush2.bf16.msra.mxu0 0
    %335 = vmatprep.subr.bf16.mxu0 0
    %336 = vmatpush2.bf16.msra.mxu0 0
    %337 = vmatprep.subr.bf16.mxu0 0
    %338 = vmatpush2.bf16.msra.mxu0 0
    %339 = vmatprep.subr.bf16.mxu0 0
    %340 = vmatpush2.bf16.msra.mxu0 0
    %341 = vmatprep.subr.bf16.mxu0 0
    %342 = vmatpush2.bf16.msra.mxu0 0
    %343 = vmatprep.subr.bf16.mxu0 0
    %344 = vmatpush2.bf16.msra.mxu0 0
    %345 = vmatprep.subr.bf16.mxu0 0
    %346 = vmatpush2.bf16.msra.mxu0 0
    %347 = vmatprep.subr.bf16.mxu0 0
    %348 = vmatpush2.bf16.msra.mxu0 0
    %349 = vmatprep.mubr.bf16.mxu0 0
    %350 = vmatmul.mubr.bf16.gmra.mxu0 %v196
    %v351 = vpop.f32.mrf.mxu0
    %v352 = vadd.f32 %v99, %v351
    %v353 = vpop.f32.mrf.mxu0
    %v354 = vadd.f32 %v103, %v353
    %v355 = vpop.f32.mrf.mxu0
    %v356 = vpop.f32.mrf.mxu0
    %357 = vdwg.mxu0
    %358 = vmatprep.subr.bf16.mxu0 0
    %359 = vmatpush1.bf16.msra.mxu0 0
    %360 = vmatprep.subr.bf16.mxu0 0
    %361 = vmatpush1.bf16.msra.mxu0 0
    %362 = vmatprep.subr.bf16.mxu0 0
    %363 = vmatpush1.bf16.msra.mxu0 0
    %364 = vmatprep.subr.bf16.mxu0 0
    %365 = vmatpush1.bf16.msra.mxu0 0
    %366 = vmatprep.subr.bf16.mxu0 0
    %367 = vmatpush1.bf16.msra.mxu0 0
    %368 = vmatprep.subr.bf16.mxu0 0
    %369 = vmatpush1.bf16.msra.mxu0 0
    %370 = vmatprep.subr.bf16.mxu0 0
    %371 = vmatpush1.bf16.msra.mxu0 0
    %372 = vmatprep.subr.bf16.mxu0 %v221
    %373 = vmatpush1.bf16.msra.mxu0 %v218
    %374 = vmatprep.subr.bf16.mxu0 0
    %375 = vmatpush2.bf16.msra.mxu0 0
    %376 = vmatprep.subr.bf16.mxu0 0
    %377 = vmatpush2.bf16.msra.mxu0 0
    %378 = vmatprep.subr.bf16.mxu0 0
    %379 = vmatpush2.bf16.msra.mxu0 0
    %380 = vmatprep.subr.bf16.mxu0 0
    %381 = vmatpush2.bf16.msra.mxu0 0
    %382 = vmatprep.subr.bf16.mxu0 0
    %383 = vmatpush2.bf16.msra.mxu0 0
    %384 = vmatprep.subr.bf16.mxu0 0
    %385 = vmatpush2.bf16.msra.mxu0 0
    %386 = vmatprep.subr.bf16.mxu0 0
    %387 = vmatpush2.bf16.msra.mxu0 0
    %388 = vmatprep.subr.bf16.mxu0 0
    %389 = vmatpush2.bf16.msra.mxu0 0
    %390 = vmatprep.mubr.bf16.mxu0 0
    %391 = vmatmul.mubr.bf16.gmra.mxu0 %v196
    %v392 = vpop.f32.mrf.mxu0
    %v393 = vadd.f32 %v107, %v392
    %v394 = vpop.f32.mrf.mxu0
    %v395 = vadd.f32 %v111, %v394
    %v396 = vpop.f32.mrf.mxu0
    %v397 = vpop.f32.mrf.mxu0
    %398 = vdwg.mxu0
    %399 = vmatprep.subr.bf16.mxu0 0
    %400 = vmatpush1.bf16.msra.mxu0 0
    %401 = vmatprep.subr.bf16.mxu0 0
    %402 = vmatpush1.bf16.msra.mxu0 0
    %403 = vmatprep.subr.bf16.mxu0 0
    %404 = vmatpush1.bf16.msra.mxu0 0
    %405 = vmatprep.subr.bf16.mxu0 0
    %406 = vmatpush1.bf16.msra.mxu0 0
    %407 = vmatprep.subr.bf16.mxu0 0
    %408 = vmatpush1.bf16.msra.mxu0 0
    %409 = vmatprep.subr.bf16.mxu0 0
    %410 = vmatpush1.bf16.msra.mxu0 0
    %411 = vmatprep.subr.bf16.mxu0 0
    %412 = vmatpush1.bf16.msra.mxu0 0
    %413 = vmatprep.subr.bf16.mxu0 %v227
    %414 = vmatpush1.bf16.msra.mxu0 %v224
    %415 = vmatprep.subr.bf16.mxu0 0
    %416 = vmatpush2.bf16.msra.mxu0 0
    %417 = vmatprep.subr.bf16.mxu0 0
    %418 = vmatpush2.bf16.msra.mxu0 0
    %419 = vmatprep.subr.bf16.mxu0 0
    %420 = vmatpush2.bf16.msra.mxu0 0
    %421 = vmatprep.subr.bf16.mxu0 0
    %422 = vmatpush2.bf16.msra.mxu0 0
    %423 = vmatprep.subr.bf16.mxu0 0
    %424 = vmatpush2.bf16.msra.mxu0 0
    %425 = vmatprep.subr.bf16.mxu0 0
    %426 = vmatpush2.bf16.msra.mxu0 0
    %427 = vmatprep.subr.bf16.mxu0 0
    %428 = vmatpush2.bf16.msra.mxu0 0
    %429 = vmatprep.subr.bf16.mxu0 0
    %430 = vmatpush2.bf16.msra.mxu0 0
    %431 = vmatprep.mubr.bf16.mxu0 0
    %432 = vmatmul.mubr.bf16.gmra.mxu0 %v196
    %v433 = vpop.f32.mrf.mxu0
    %v434 = vadd.f32 %v115, %v433
    %v435 = vpop.f32.mrf.mxu0
    %v436 = vadd.f32 %v119, %v435
    %v437 = vpop.f32.mrf.mxu0
    %v438 = vpop.f32.mrf.mxu0
    %439 = vdwg.mxu0
    %440 = vmatprep.subr.bf16.mxu0 0
    %441 = vmatpush1.bf16.msra.mxu0 0
    %442 = vmatprep.subr.bf16.mxu0 0
    %443 = vmatpush1.bf16.msra.mxu0 0
    %444 = vmatprep.subr.bf16.mxu0 0
    %445 = vmatpush1.bf16.msra.mxu0 0
    %446 = vmatprep.subr.bf16.mxu0 0
    %447 = vmatpush1.bf16.msra.mxu0 0
    %448 = vmatprep.subr.bf16.mxu0 0
    %449 = vmatpush1.bf16.msra.mxu0 0
    %450 = vmatprep.subr.bf16.mxu0 0
    %451 = vmatpush1.bf16.msra.mxu0 0
    %452 = vmatprep.subr.bf16.mxu0 0
    %453 = vmatpush1.bf16.msra.mxu0 0
    %454 = vmatprep.subr.bf16.mxu0 %v233
    %455 = vmatpush1.bf16.msra.mxu0 %v230
    %456 = vmatprep.subr.bf16.mxu0 0
    %457 = vmatpush2.bf16.msra.mxu0 0
    %458 = vmatprep.subr.bf16.mxu0 0
    %459 = vmatpush2.bf16.msra.mxu0 0
    %460 = vmatprep.subr.bf16.mxu0 0
    %461 = vmatpush2.bf16.msra.mxu0 0
    %462 = vmatprep.subr.bf16.mxu0 0
    %463 = vmatpush2.bf16.msra.mxu0 0
    %464 = vmatprep.subr.bf16.mxu0 0
    %465 = vmatpush2.bf16.msra.mxu0 0
    %466 = vmatprep.subr.bf16.mxu0 0
    %467 = vmatpush2.bf16.msra.mxu0 0
    %468 = vmatprep.subr.bf16.mxu0 0
    %469 = vmatpush2.bf16.msra.mxu0 0
    %470 = vmatprep.subr.bf16.mxu0 0
    %471 = vmatpush2.bf16.msra.mxu0 0
    %472 = vmatprep.mubr.bf16.mxu0 0
    %473 = vmatmul.mubr.bf16.gmra.mxu0 %v196
    %v474 = vpop.f32.mrf.mxu0
    %v475 = vadd.f32 %v123, %v474
    %v476 = vpop.f32.mrf.mxu0
    %v477 = vadd.f32 %v127, %v476
    %v478 = vpop.f32.mrf.mxu0
    %v479 = vpop.f32.mrf.mxu0
    %480 = vdwg.mxu0
    %481 = vst [vmem:[#allocation8] sm:$0xff] %v270
    %482 = vst [vmem:[#allocation8 + $0x8] sm:$0xff] %v272
    %483 = vst [vmem:[#allocation8 + $0x10] sm:$0xff] %v311
    %484 = vst [vmem:[#allocation8 + $0x18] sm:$0xff] %v313
    %v485 = vmax.f32 %v270, 0.0
    %v486 = vmax.f32 %v272, 0.0
    %v487 = vmax.f32 %v311, 0.0
    %v488 = vmax.f32 %v313, 0.0
    %v489 = vpack.c.bf16 %v485, %v485
    %v490 = vpack.c.bf16 %v486, %v486
    %v491 = vpack.c.bf16 %v487, %v487
    %v492 = vpack.c.bf16 %v488, %v488
    %v493 = vmax.f32 %v352, 0.0
    %v494 = vmax.f32 %v354, 0.0
    %v495 = vmax.f32 %v393, 0.0
    %v496 = vmax.f32 %v395, 0.0
    %v497 = vmax.f32 %v434, 0.0
    %v498 = vmax.f32 %v436, 0.0
    %v499 = vmax.f32 %v475, 0.0
    %v500 = vmax.f32 %v477, 0.0
    %v501 = vpack.c.bf16 %v493, %v493
    %v502 = vpack.c.bf16 %v494, %v494
    %v503 = vpack.c.bf16 %v495, %v495
    %v504 = vpack.c.bf16 %v496, %v496
    %v505 = vpack.c.bf16 %v497, %v497
    %v506 = vpack.c.bf16 %v498, %v498
    %v507 = vpack.c.bf16 %v499, %v499
    %v508 = vpack.c.bf16 %v500, %v500
    %v509 = vld [vmem:[#allocation5] sm:$0xf]
    %v510 = vld [vmem:[#allocation5 + $0x4] sm:$0xf]
    %v511 = vld [vmem:[#allocation5 + $0x8] sm:$0xf]
    %v512 = vld [vmem:[#allocation5 + $0xc] sm:$0xf]
    %v513 = vld [vmem:[#allocation5 + $0x10] sm:$0xf]
    %v514 = vld [vmem:[#allocation5 + $0x14] sm:$0xf]
    %v515 = vld [vmem:[#allocation5 + $0x18] sm:$0xf]
    %v516 = vld [vmem:[#allocation5 + $0x1c] sm:$0xf]
    %v517 = vld [vmem:[#allocation5 + $0x20] sm:$0xf]
    %v518 = vld [vmem:[#allocation5 + $0x24] sm:$0xf]
    %v519 = vld [vmem:[#allocation5 + $0x28] sm:$0xf]
    %v520 = vld [vmem:[#allocation5 + $0x2c] sm:$0xf]
    %v521 = vld [vmem:[#allocation5 + $0x30] sm:$0xf]
    %v522 = vld [vmem:[#allocation5 + $0x34] sm:$0xf]
    %v523 = vld [vmem:[#allocation5 + $0x38] sm:$0xf]
    %v524 = vld [vmem:[#allocation5 + $0x3c] sm:$0xf]
    %v525 = vld [vmem:[#allocation5 + $0x40] sm:$0xf]
    %v526 = vld [vmem:[#allocation5 + $0x44] sm:$0xf]
    %v527 = vld [vmem:[#allocation5 + $0x48] sm:$0xf]
    %v528 = vld [vmem:[#allocation5 + $0x4c] sm:$0xf]
    %v529 = vld [vmem:[#allocation5 + $0x50] sm:$0xf]
    %v530 = vld [vmem:[#allocation5 + $0x54] sm:$0xf]
    %v531 = vld [vmem:[#allocation5 + $0x58] sm:$0xf]
    %v532 = vld [vmem:[#allocation5 + $0x5c] sm:$0xf]
    %v533 = vld [vmem:[#allocation5 + $0x60] sm:$0xf]
    %v534 = vld [vmem:[#allocation5 + $0x64] sm:$0xf]
    %v535 = vld [vmem:[#allocation5 + $0x68] sm:$0xf]
    %v536 = vld [vmem:[#allocation5 + $0x6c] sm:$0xf]
    %v537 = vld [vmem:[#allocation5 + $0x70] sm:$0xf]
    %v538 = vld [vmem:[#allocation5 + $0x74] sm:$0xf]
    %v539 = vld [vmem:[#allocation5 + $0x78] sm:$0xf]
    %v540 = vld [vmem:[#allocation5 + $0x7c] sm:$0xf]
    %v541 = vld [vmem:[#allocation5 + $0x80] sm:$0xf]
    %v542 = vld [vmem:[#allocation5 + $0x84] sm:$0xf]
    %v543 = vld [vmem:[#allocation5 + $0x88] sm:$0xf]
    %v544 = vld [vmem:[#allocation5 + $0x8c] sm:$0xf]
    %v545 = vld [vmem:[#allocation5 + $0x90] sm:$0xf]
    %v546 = vld [vmem:[#allocation5 + $0x94] sm:$0xf]
    %v547 = vld [vmem:[#allocation5 + $0x98] sm:$0xf]
    %v548 = vld [vmem:[#allocation5 + $0x9c] sm:$0xf]
    %v549 = vld [vmem:[#allocation5 + $0xa0] sm:$0xf]
    %v550 = vld [vmem:[#allocation5 + $0xa4] sm:$0xf]
    %v551 = vld [vmem:[#allocation5 + $0xa8] sm:$0xf]
    %v552 = vld [vmem:[#allocation5 + $0xac] sm:$0xf]
    %v553 = vld [vmem:[#allocation5 + $0xb0] sm:$0xf]
    %v554 = vld [vmem:[#allocation5 + $0xb4] sm:$0xf]
    %v555 = vld [vmem:[#allocation5 + $0xb8] sm:$0xf]
    %v556 = vld [vmem:[#allocation5 + $0xbc] sm:$0xf]
    %v557 = vld [vmem:[#allocation5 + $0xc0] sm:$0xf]
    %v558 = vld [vmem:[#allocation5 + $0xc4] sm:$0xf]
    %v559 = vld [vmem:[#allocation5 + $0xc8] sm:$0xf]
    %v560 = vld [vmem:[#allocation5 + $0xcc] sm:$0xf]
    %v561 = vld [vmem:[#allocation5 + $0xd0] sm:$0xf]
    %v562 = vld [vmem:[#allocation5 + $0xd4] sm:$0xf]
    %v563 = vld [vmem:[#allocation5 + $0xd8] sm:$0xf]
    %v564 = vld [vmem:[#allocation5 + $0xdc] sm:$0xf]
    %v565 = vld [vmem:[#allocation5 + $0xe0] sm:$0xf]
    %v566 = vld [vmem:[#allocation5 + $0xe4] sm:$0xf]
    %v567 = vld [vmem:[#allocation5 + $0xe8] sm:$0xf]
    %v568 = vld [vmem:[#allocation5 + $0xec] sm:$0xf]
    %v569 = vld [vmem:[#allocation5 + $0xf0] sm:$0xf]
    %v570 = vld [vmem:[#allocation5 + $0xf4] sm:$0xf]
    %v571 = vld [vmem:[#allocation5 + $0xf8] sm:$0xf]
    %v572 = vld [vmem:[#allocation5 + $0xfc] sm:$0xf]
    %v573 = vld [vmem:[%s4] sm:$0x1]
    %v575 = vlaneseq
    %v576 = vshrl.u32 %v575, 7
    %v577 = vsub.s32 0, %v576
    %v578 = vrot.slane %v573, %v577
    %v644 = vunpack.c.l.b16 %v509
    %v645 = vunpack.c.l.b16 %v510
    %v646 = vunpack.c.l.b16 %v511
    %v647 = vunpack.c.l.b16 %v512
    %v648 = vunpack.c.l.b16 %v513
    %v649 = vunpack.c.l.b16 %v514
    %v650 = vunpack.c.l.b16 %v515
    %v651 = vunpack.c.l.b16 %v516
    %v652 = vunpack.c.l.b16 %v517
    %v653 = vunpack.c.l.b16 %v518
    %v654 = vunpack.c.l.b16 %v519
    %v655 = vunpack.c.l.b16 %v520
    %v656 = vunpack.c.l.b16 %v521
    %v657 = vunpack.c.l.b16 %v522
    %v658 = vunpack.c.l.b16 %v523
    %v659 = vunpack.c.l.b16 %v524
    %v660 = vunpack.c.l.b16 %v525
    %v661 = vunpack.c.l.b16 %v526
    %v662 = vunpack.c.l.b16 %v527
    %v663 = vunpack.c.l.b16 %v528
    %v664 = vunpack.c.l.b16 %v529
    %v665 = vunpack.c.l.b16 %v530
    %v666 = vunpack.c.l.b16 %v531
    %v667 = vunpack.c.l.b16 %v532
    %v668 = vunpack.c.l.b16 %v533
    %v669 = vunpack.c.l.b16 %v534
    %v670 = vunpack.c.l.b16 %v535
    %v671 = vunpack.c.l.b16 %v536
    %v672 = vunpack.c.l.b16 %v537
    %v673 = vunpack.c.l.b16 %v538
    %v674 = vunpack.c.l.b16 %v539
    %v675 = vunpack.c.l.b16 %v540
    %v676 = vunpack.c.l.b16 %v541
    %v677 = vunpack.c.l.b16 %v542
    %v678 = vunpack.c.l.b16 %v543
    %v679 = vunpack.c.l.b16 %v544
    %v680 = vunpack.c.l.b16 %v545
    %v681 = vunpack.c.l.b16 %v546
    %v682 = vunpack.c.l.b16 %v547
    %v683 = vunpack.c.l.b16 %v548
    %v684 = vunpack.c.l.b16 %v549
    %v685 = vunpack.c.l.b16 %v550
    %v686 = vunpack.c.l.b16 %v551
    %v687 = vunpack.c.l.b16 %v552
    %v688 = vunpack.c.l.b16 %v553
    %v689 = vunpack.c.l.b16 %v554
    %v690 = vunpack.c.l.b16 %v555
    %v691 = vunpack.c.l.b16 %v556
    %v692 = vunpack.c.l.b16 %v557
    %v693 = vunpack.c.l.b16 %v558
    %v694 = vunpack.c.l.b16 %v559
    %v695 = vunpack.c.l.b16 %v560
    %v696 = vunpack.c.l.b16 %v561
    %v697 = vunpack.c.l.b16 %v562
    %v698 = vunpack.c.l.b16 %v563
    %v699 = vunpack.c.l.b16 %v564
    %v700 = vunpack.c.l.b16 %v565
    %v701 = vunpack.c.l.b16 %v566
    %v702 = vunpack.c.l.b16 %v567
    %v703 = vunpack.c.l.b16 %v568
    %v704 = vunpack.c.l.b16 %v569
    %v705 = vunpack.c.l.b16 %v570
    %v706 = vunpack.c.l.b16 %v571
    %v707 = vunpack.c.l.b16 %v572
    %v708 = vpack.c.b16 %v645, %v644
    %v709 = vpack.c.b16 %v647, %v646
    %v710 = vpack.c.b16 %v649, %v648
    %v711 = vpack.c.b16 %v651, %v650
    %v712 = vpack.c.b16 %v653, %v652
    %v713 = vpack.c.b16 %v655, %v654
    %v714 = vpack.c.b16 %v657, %v656
    %v715 = vpack.c.b16 %v659, %v658
    %v716 = vpack.c.b16 %v661, %v660
    %v717 = vpack.c.b16 %v663, %v662
    %v718 = vpack.c.b16 %v665, %v664
    %v719 = vpack.c.b16 %v667, %v666
    %v720 = vpack.c.b16 %v669, %v668
    %v721 = vpack.c.b16 %v671, %v670
    %v722 = vpack.c.b16 %v673, %v672
    %v723 = vpack.c.b16 %v675, %v674
    %v724 = vpack.c.b16 %v677, %v676
    %v725 = vpack.c.b16 %v679, %v678
    %v726 = vpack.c.b16 %v681, %v680
    %v727 = vpack.c.b16 %v683, %v682
    %v728 = vpack.c.b16 %v685, %v684
    %v729 = vpack.c.b16 %v687, %v686
    %v730 = vpack.c.b16 %v689, %v688
    %v731 = vpack.c.b16 %v691, %v690
    %v732 = vpack.c.b16 %v693, %v692
    %v733 = vpack.c.b16 %v695, %v694
    %v734 = vpack.c.b16 %v697, %v696
    %v735 = vpack.c.b16 %v699, %v698
    %v736 = vpack.c.b16 %v701, %v700
    %v737 = vpack.c.b16 %v703, %v702
    %v738 = vpack.c.b16 %v705, %v704
    %v739 = vpack.c.b16 %v707, %v706
    %772 = vmatprep.subr.bf16.mxu0 0
    %773 = vmatpush1.bf16.msra.mxu0 %v715
    %774 = vmatprep.subr.bf16.mxu0 0
    %775 = vmatpush1.bf16.msra.mxu0 %v714
    %776 = vmatprep.subr.bf16.mxu0 0
    %777 = vmatpush1.bf16.msra.mxu0 %v713
    %778 = vmatprep.subr.bf16.mxu0 0
    %779 = vmatpush1.bf16.msra.mxu0 %v712
    %780 = vmatprep.subr.bf16.mxu0 0
    %781 = vmatpush1.bf16.msra.mxu0 %v711
    %782 = vmatprep.subr.bf16.mxu0 0
    %783 = vmatpush1.bf16.msra.mxu0 %v710
    %784 = vmatprep.subr.bf16.mxu0 0
    %785 = vmatpush1.bf16.msra.mxu0 %v709
    %786 = vmatprep.subr.bf16.mxu0 0
    %787 = vmatpush1.bf16.msra.mxu0 %v708
    %788 = vmatprep.subr.bf16.mxu0 0
    %789 = vmatpush2.bf16.msra.mxu0 %v723
    %790 = vmatprep.subr.bf16.mxu0 0
    %791 = vmatpush2.bf16.msra.mxu0 %v722
    %792 = vmatprep.subr.bf16.mxu0 0
    %793 = vmatpush2.bf16.msra.mxu0 %v721
    %794 = vmatprep.subr.bf16.mxu0 0
    %795 = vmatpush2.bf16.msra.mxu0 %v720
    %796 = vmatprep.subr.bf16.mxu0 0
    %797 = vmatpush2.bf16.msra.mxu0 %v719
    %798 = vmatprep.subr.bf16.mxu0 0
    %799 = vmatpush2.bf16.msra.mxu0 %v718
    %800 = vmatprep.subr.bf16.mxu0 0
    %801 = vmatpush2.bf16.msra.mxu0 %v717
    %802 = vmatprep.subr.bf16.mxu0 0
    %803 = vmatpush2.bf16.msra.mxu0 %v716
    %804 = vmatprep.mubr.bf16.mxu0 %v490
    %805 = vmatmul.mubr.bf16.gmra.mxu0 %v489
    %v806 = vpop.f32.mrf.mxu0
    %v807 = vadd.f32 %v578, %v806
    %v808 = vpop.f32.mrf.mxu0
    %v809 = vpop.f32.mrf.mxu0
    %v810 = vpop.f32.mrf.mxu0
    %811 = vdwg.mxu0
    %812 = vmatprep.subr.bf16.mxu0 0
    %813 = vmatpush1.bf16.msra.mxu0 %v731
    %814 = vmatprep.subr.bf16.mxu0 0
    %815 = vmatpush1.bf16.msra.mxu0 %v730
    %816 = vmatprep.subr.bf16.mxu0 0
    %817 = vmatpush1.bf16.msra.mxu0 %v729
    %818 = vmatprep.subr.bf16.mxu0 0
    %819 = vmatpush1.bf16.msra.mxu0 %v728
    %820 = vmatprep.subr.bf16.mxu0 0
    %821 = vmatpush1.bf16.msra.mxu0 %v727
    %822 = vmatprep.subr.bf16.mxu0 0
    %823 = vmatpush1.bf16.msra.mxu0 %v726
    %824 = vmatprep.subr.bf16.mxu0 0
    %825 = vmatpush1.bf16.msra.mxu0 %v725
    %826 = vmatprep.subr.bf16.mxu0 0
    %827 = vmatpush1.bf16.msra.mxu0 %v724
    %828 = vmatprep.subr.bf16.mxu0 0
    %829 = vmatpush2.bf16.msra.mxu0 %v739
    %830 = vmatprep.subr.bf16.mxu0 0
    %831 = vmatpush2.bf16.msra.mxu0 %v738
    %832 = vmatprep.subr.bf16.mxu0 0
    %833 = vmatpush2.bf16.msra.mxu0 %v737
    %834 = vmatprep.subr.bf16.mxu0 0
    %835 = vmatpush2.bf16.msra.mxu0 %v736
    %836 = vmatprep.subr.bf16.mxu0 0
    %837 = vmatpush2.bf16.msra.mxu0 %v735
    %838 = vmatprep.subr.bf16.mxu0 0
    %839 = vmatpush2.bf16.msra.mxu0 %v734
    %840 = vmatprep.subr.bf16.mxu0 0
    %841 = vmatpush2.bf16.msra.mxu0 %v733
    %842 = vmatprep.subr.bf16.mxu0 0
    %843 = vmatpush2.bf16.msra.mxu0 %v732
    %844 = vmatprep.mubr.bf16.mxu0 %v492
    %845 = vmatmul.mubr.bf16.gmra.mxu0 %v491
    %v846 = vpop.f32.mrf.mxu0
    %v847 = vadd.f32 %v807, %v846
    %v848 = vpop.f32.mrf.mxu0
    %v849 = vpop.f32.mrf.mxu0
    %v850 = vpop.f32.mrf.mxu0
    %851 = vdwg.mxu0
    %852 = vst [vmem:[#allocation9] sm:$0xff] %v847
    %v853 = vld [vmem:[#allocation7] sm:$0xf]
    %v854 = vld [vmem:[#allocation7 + $0x4] sm:$0xf]
    %v855 = vld [vmem:[#allocation7 + $0x8] sm:$0xf]
    %v856 = vld [vmem:[#allocation7 + $0xc] sm:$0xf]
    %v857 = vld [vmem:[#allocation7 + $0x10] sm:$0xf]
    %v858 = vld [vmem:[#allocation7 + $0x14] sm:$0xf]
    %v859 = vld [vmem:[#allocation7 + $0x18] sm:$0xf]
    %v860 = vld [vmem:[#allocation7 + $0x1c] sm:$0xf]
    %v861 = vld [vmem:[#allocation7 + $0x20] sm:$0xf]
    %v862 = vld [vmem:[#allocation7 + $0x24] sm:$0xf]
    %v863 = vld [vmem:[#allocation7 + $0x28] sm:$0xf]
    %v864 = vld [vmem:[#allocation7 + $0x2c] sm:$0xf]
    %v865 = vld [vmem:[#allocation7 + $0x30] sm:$0xf]
    %v866 = vld [vmem:[#allocation7 + $0x34] sm:$0xf]
    %v867 = vld [vmem:[#allocation7 + $0x38] sm:$0xf]
    %v868 = vld [vmem:[#allocation7 + $0x3c] sm:$0xf]
    %v869 = vld [vmem:[#allocation7 + $0x40] sm:$0xf]
    %v870 = vld [vmem:[#allocation7 + $0x44] sm:$0xf]
    %v871 = vld [vmem:[#allocation7 + $0x48] sm:$0xf]
    %v872 = vld [vmem:[#allocation7 + $0x4c] sm:$0xf]
    %v873 = vld [vmem:[#allocation7 + $0x50] sm:$0xf]
    %v874 = vld [vmem:[#allocation7 + $0x54] sm:$0xf]
    %v875 = vld [vmem:[#allocation7 + $0x58] sm:$0xf]
    %v876 = vld [vmem:[#allocation7 + $0x5c] sm:$0xf]
    %v877 = vld [vmem:[#allocation7 + $0x60] sm:$0xf]
    %v878 = vld [vmem:[#allocation7 + $0x64] sm:$0xf]
    %v879 = vld [vmem:[#allocation7 + $0x68] sm:$0xf]
    %v880 = vld [vmem:[#allocation7 + $0x6c] sm:$0xf]
    %v881 = vld [vmem:[#allocation7 + $0x70] sm:$0xf]
    %v882 = vld [vmem:[#allocation7 + $0x74] sm:$0xf]
    %v883 = vld [vmem:[#allocation7 + $0x78] sm:$0xf]
    %v884 = vld [vmem:[#allocation7 + $0x7c] sm:$0xf]
    %v885 = vld [vmem:[#allocation7 + $0x80] sm:$0xf]
    %v886 = vld [vmem:[#allocation7 + $0x84] sm:$0xf]
    %v887 = vld [vmem:[#allocation7 + $0x88] sm:$0xf]
    %v888 = vld [vmem:[#allocation7 + $0x8c] sm:$0xf]
    %v889 = vld [vmem:[#allocation7 + $0x90] sm:$0xf]
    %v890 = vld [vmem:[#allocation7 + $0x94] sm:$0xf]
    %v891 = vld [vmem:[#allocation7 + $0x98] sm:$0xf]
    %v892 = vld [vmem:[#allocation7 + $0x9c] sm:$0xf]
    %v893 = vld [vmem:[#allocation7 + $0xa0] sm:$0xf]
    %v894 = vld [vmem:[#allocation7 + $0xa4] sm:$0xf]
    %v895 = vld [vmem:[#allocation7 + $0xa8] sm:$0xf]
    %v896 = vld [vmem:[#allocation7 + $0xac] sm:$0xf]
    %v897 = vld [vmem:[#allocation7 + $0xb0] sm:$0xf]
    %v898 = vld [vmem:[#allocation7 + $0xb4] sm:$0xf]
    %v899 = vld [vmem:[#allocation7 + $0xb8] sm:$0xf]
    %v900 = vld [vmem:[#allocation7 + $0xbc] sm:$0xf]
    %v901 = vld [vmem:[#allocation7 + $0xc0] sm:$0xf]
    %v902 = vld [vmem:[#allocation7 + $0xc4] sm:$0xf]
    %v903 = vld [vmem:[#allocation7 + $0xc8] sm:$0xf]
    %v904 = vld [vmem:[#allocation7 + $0xcc] sm:$0xf]
    %v905 = vld [vmem:[#allocation7 + $0xd0] sm:$0xf]
    %v906 = vld [vmem:[#allocation7 + $0xd4] sm:$0xf]
    %v907 = vld [vmem:[#allocation7 + $0xd8] sm:$0xf]
    %v908 = vld [vmem:[#allocation7 + $0xdc] sm:$0xf]
    %v909 = vld [vmem:[#allocation7 + $0xe0] sm:$0xf]
    %v910 = vld [vmem:[#allocation7 + $0xe4] sm:$0xf]
    %v911 = vld [vmem:[#allocation7 + $0xe8] sm:$0xf]
    %v912 = vld [vmem:[#allocation7 + $0xec] sm:$0xf]
    %v913 = vld [vmem:[#allocation7 + $0xf0] sm:$0xf]
    %v914 = vld [vmem:[#allocation7 + $0xf4] sm:$0xf]
    %v915 = vld [vmem:[#allocation7 + $0xf8] sm:$0xf]
    %v916 = vld [vmem:[#allocation7 + $0xfc] sm:$0xf]
    %v917 = vld [vmem:[#allocation7 + $0x100] sm:$0xf]
    %v918 = vld [vmem:[#allocation7 + $0x104] sm:$0xf]
    %v919 = vld [vmem:[#allocation7 + $0x108] sm:$0xf]
    %v920 = vld [vmem:[#allocation7 + $0x10c] sm:$0xf]
    %v921 = vld [vmem:[#allocation7 + $0x110] sm:$0xf]
    %v922 = vld [vmem:[#allocation7 + $0x114] sm:$0xf]
    %v923 = vld [vmem:[#allocation7 + $0x118] sm:$0xf]
    %v924 = vld [vmem:[#allocation7 + $0x11c] sm:$0xf]
    %v925 = vld [vmem:[#allocation7 + $0x120] sm:$0xf]
    %v926 = vld [vmem:[#allocation7 + $0x124] sm:$0xf]
    %v927 = vld [vmem:[#allocation7 + $0x128] sm:$0xf]
    %v928 = vld [vmem:[#allocation7 + $0x12c] sm:$0xf]
    %v929 = vld [vmem:[#allocation7 + $0x130] sm:$0xf]
    %v930 = vld [vmem:[#allocation7 + $0x134] sm:$0xf]
    %v931 = vld [vmem:[#allocation7 + $0x138] sm:$0xf]
    %v932 = vld [vmem:[#allocation7 + $0x13c] sm:$0xf]
    %v933 = vld [vmem:[#allocation7 + $0x140] sm:$0xf]
    %v934 = vld [vmem:[#allocation7 + $0x144] sm:$0xf]
    %v935 = vld [vmem:[#allocation7 + $0x148] sm:$0xf]
    %v936 = vld [vmem:[#allocation7 + $0x14c] sm:$0xf]
    %v937 = vld [vmem:[#allocation7 + $0x150] sm:$0xf]
    %v938 = vld [vmem:[#allocation7 + $0x154] sm:$0xf]
    %v939 = vld [vmem:[#allocation7 + $0x158] sm:$0xf]
    %v940 = vld [vmem:[#allocation7 + $0x15c] sm:$0xf]
    %v941 = vld [vmem:[#allocation7 + $0x160] sm:$0xf]
    %v942 = vld [vmem:[#allocation7 + $0x164] sm:$0xf]
    %v943 = vld [vmem:[#allocation7 + $0x168] sm:$0xf]
    %v944 = vld [vmem:[#allocation7 + $0x16c] sm:$0xf]
    %v945 = vld [vmem:[#allocation7 + $0x170] sm:$0xf]
    %v946 = vld [vmem:[#allocation7 + $0x174] sm:$0xf]
    %v947 = vld [vmem:[#allocation7 + $0x178] sm:$0xf]
    %v948 = vld [vmem:[#allocation7 + $0x17c] sm:$0xf]
    %v949 = vld [vmem:[#allocation7 + $0x180] sm:$0xf]
    %v950 = vld [vmem:[#allocation7 + $0x184] sm:$0xf]
    %v951 = vld [vmem:[#allocation7 + $0x188] sm:$0xf]
    %v952 = vld [vmem:[#allocation7 + $0x18c] sm:$0xf]
    %v953 = vld [vmem:[#allocation7 + $0x190] sm:$0xf]
    %v954 = vld [vmem:[#allocation7 + $0x194] sm:$0xf]
    %v955 = vld [vmem:[#allocation7 + $0x198] sm:$0xf]
    %v956 = vld [vmem:[#allocation7 + $0x19c] sm:$0xf]
    %v957 = vld [vmem:[#allocation7 + $0x1a0] sm:$0xf]
    %v958 = vld [vmem:[#allocation7 + $0x1a4] sm:$0xf]
    %v959 = vld [vmem:[#allocation7 + $0x1a8] sm:$0xf]
    %v960 = vld [vmem:[#allocation7 + $0x1ac] sm:$0xf]
    %v961 = vld [vmem:[#allocation7 + $0x1b0] sm:$0xf]
    %v962 = vld [vmem:[#allocation7 + $0x1b4] sm:$0xf]
    %v963 = vld [vmem:[#allocation7 + $0x1b8] sm:$0xf]
    %v964 = vld [vmem:[#allocation7 + $0x1bc] sm:$0xf]
    %v965 = vld [vmem:[#allocation7 + $0x1c0] sm:$0xf]
    %v966 = vld [vmem:[#allocation7 + $0x1c4] sm:$0xf]
    %v967 = vld [vmem:[#allocation7 + $0x1c8] sm:$0xf]
    %v968 = vld [vmem:[#allocation7 + $0x1cc] sm:$0xf]
    %v969 = vld [vmem:[#allocation7 + $0x1d0] sm:$0xf]
    %v970 = vld [vmem:[#allocation7 + $0x1d4] sm:$0xf]
    %v971 = vld [vmem:[#allocation7 + $0x1d8] sm:$0xf]
    %v972 = vld [vmem:[#allocation7 + $0x1dc] sm:$0xf]
    %v973 = vld [vmem:[#allocation7 + $0x1e0] sm:$0xf]
    %v974 = vld [vmem:[#allocation7 + $0x1e4] sm:$0xf]
    %v975 = vld [vmem:[#allocation7 + $0x1e8] sm:$0xf]
    %v976 = vld [vmem:[#allocation7 + $0x1ec] sm:$0xf]
    %v977 = vld [vmem:[#allocation7 + $0x1f0] sm:$0xf]
    %v978 = vld [vmem:[#allocation7 + $0x1f4] sm:$0xf]
    %v979 = vld [vmem:[#allocation7 + $0x1f8] sm:$0xf]
    %v980 = vld [vmem:[#allocation7 + $0x1fc] sm:$0xf]
    %v981 = vld [vmem:[%s6] sm:$0x1]
    %v983 = vlaneseq
    %v984 = vshrl.u32 %v983, 7
    %v985 = vsub.s32 0, %v984
    %v986 = vrot.slane %v981, %v985
    %v1116 = vunpack.c.l.b16 %v853
    %v1117 = vunpack.c.l.b16 %v854
    %v1118 = vunpack.c.l.b16 %v855
    %v1119 = vunpack.c.l.b16 %v856
    %v1120 = vunpack.c.l.b16 %v857
    %v1121 = vunpack.c.l.b16 %v858
    %v1122 = vunpack.c.l.b16 %v859
    %v1123 = vunpack.c.l.b16 %v860
    %v1124 = vunpack.c.l.b16 %v861
    %v1125 = vunpack.c.l.b16 %v862
    %v1126 = vunpack.c.l.b16 %v863
    %v1127 = vunpack.c.l.b16 %v864
    %v1128 = vunpack.c.l.b16 %v865
    %v1129 = vunpack.c.l.b16 %v866
    %v1130 = vunpack.c.l.b16 %v867
    %v1131 = vunpack.c.l.b16 %v868
    %v1132 = vunpack.c.l.b16 %v869
    %v1133 = vunpack.c.l.b16 %v870
    %v1134 = vunpack.c.l.b16 %v871
    %v1135 = vunpack.c.l.b16 %v872
    %v1136 = vunpack.c.l.b16 %v873
    %v1137 = vunpack.c.l.b16 %v874
    %v1138 = vunpack.c.l.b16 %v875
    %v1139 = vunpack.c.l.b16 %v876
    %v1140 = vunpack.c.l.b16 %v877
    %v1141 = vunpack.c.l.b16 %v878
    %v1142 = vunpack.c.l.b16 %v879
    %v1143 = vunpack.c.l.b16 %v880
    %v1144 = vunpack.c.l.b16 %v881
    %v1145 = vunpack.c.l.b16 %v882
    %v1146 = vunpack.c.l.b16 %v883
    %v1147 = vunpack.c.l.b16 %v884
    %v1148 = vunpack.c.l.b16 %v885
    %v1149 = vunpack.c.l.b16 %v886
    %v1150 = vunpack.c.l.b16 %v887
    %v1151 = vunpack.c.l.b16 %v888
    %v1152 = vunpack.c.l.b16 %v889
    %v1153 = vunpack.c.l.b16 %v890
    %v1154 = vunpack.c.l.b16 %v891
    %v1155 = vunpack.c.l.b16 %v892
    %v1156 = vunpack.c.l.b16 %v893
    %v1157 = vunpack.c.l.b16 %v894
    %v1158 = vunpack.c.l.b16 %v895
    %v1159 = vunpack.c.l.b16 %v896
    %v1160 = vunpack.c.l.b16 %v897
    %v1161 = vunpack.c.l.b16 %v898
    %v1162 = vunpack.c.l.b16 %v899
    %v1163 = vunpack.c.l.b16 %v900
    %v1164 = vunpack.c.l.b16 %v901
    %v1165 = vunpack.c.l.b16 %v902
    %v1166 = vunpack.c.l.b16 %v903
    %v1167 = vunpack.c.l.b16 %v904
    %v1168 = vunpack.c.l.b16 %v905
    %v1169 = vunpack.c.l.b16 %v906
    %v1170 = vunpack.c.l.b16 %v907
    %v1171 = vunpack.c.l.b16 %v908
    %v1172 = vunpack.c.l.b16 %v909
    %v1173 = vunpack.c.l.b16 %v910
    %v1174 = vunpack.c.l.b16 %v911
    %v1175 = vunpack.c.l.b16 %v912
    %v1176 = vunpack.c.l.b16 %v913
    %v1177 = vunpack.c.l.b16 %v914
    %v1178 = vunpack.c.l.b16 %v915
    %v1179 = vunpack.c.l.b16 %v916
    %v1180 = vunpack.c.l.b16 %v917
    %v1181 = vunpack.c.l.b16 %v918
    %v1182 = vunpack.c.l.b16 %v919
    %v1183 = vunpack.c.l.b16 %v920
    %v1184 = vunpack.c.l.b16 %v921
    %v1185 = vunpack.c.l.b16 %v922
    %v1186 = vunpack.c.l.b16 %v923
    %v1187 = vunpack.c.l.b16 %v924
    %v1188 = vunpack.c.l.b16 %v925
    %v1189 = vunpack.c.l.b16 %v926
    %v1190 = vunpack.c.l.b16 %v927
    %v1191 = vunpack.c.l.b16 %v928
    %v1192 = vunpack.c.l.b16 %v929
    %v1193 = vunpack.c.l.b16 %v930
    %v1194 = vunpack.c.l.b16 %v931
    %v1195 = vunpack.c.l.b16 %v932
    %v1196 = vunpack.c.l.b16 %v933
    %v1197 = vunpack.c.l.b16 %v934
    %v1198 = vunpack.c.l.b16 %v935
    %v1199 = vunpack.c.l.b16 %v936
    %v1200 = vunpack.c.l.b16 %v937
    %v1201 = vunpack.c.l.b16 %v938
    %v1202 = vunpack.c.l.b16 %v939
    %v1203 = vunpack.c.l.b16 %v940
    %v1204 = vunpack.c.l.b16 %v941
    %v1205 = vunpack.c.l.b16 %v942
    %v1206 = vunpack.c.l.b16 %v943
    %v1207 = vunpack.c.l.b16 %v944
    %v1208 = vunpack.c.l.b16 %v945
    %v1209 = vunpack.c.l.b16 %v946
    %v1210 = vunpack.c.l.b16 %v947
    %v1211 = vunpack.c.l.b16 %v948
    %v1212 = vunpack.c.l.b16 %v949
    %v1213 = vunpack.c.l.b16 %v950
    %v1214 = vunpack.c.l.b16 %v951
    %v1215 = vunpack.c.l.b16 %v952
    %v1216 = vunpack.c.l.b16 %v953
    %v1217 = vunpack.c.l.b16 %v954
    %v1218 = vunpack.c.l.b16 %v955
    %v1219 = vunpack.c.l.b16 %v956
    %v1220 = vunpack.c.l.b16 %v957
    %v1221 = vunpack.c.l.b16 %v958
    %v1222 = vunpack.c.l.b16 %v959
    %v1223 = vunpack.c.l.b16 %v960
    %v1224 = vunpack.c.l.b16 %v961
    %v1225 = vunpack.c.l.b16 %v962
    %v1226 = vunpack.c.l.b16 %v963
    %v1227 = vunpack.c.l.b16 %v964
    %v1228 = vunpack.c.l.b16 %v965
    %v1229 = vunpack.c.l.b16 %v966
    %v1230 = vunpack.c.l.b16 %v967
    %v1231 = vunpack.c.l.b16 %v968
    %v1232 = vunpack.c.l.b16 %v969
    %v1233 = vunpack.c.l.b16 %v970
    %v1234 = vunpack.c.l.b16 %v971
    %v1235 = vunpack.c.l.b16 %v972
    %v1236 = vunpack.c.l.b16 %v973
    %v1237 = vunpack.c.l.b16 %v974
    %v1238 = vunpack.c.l.b16 %v975
    %v1239 = vunpack.c.l.b16 %v976
    %v1240 = vunpack.c.l.b16 %v977
    %v1241 = vunpack.c.l.b16 %v978
    %v1242 = vunpack.c.l.b16 %v979
    %v1243 = vunpack.c.l.b16 %v980
    %v1244 = vpack.c.b16 %v1117, %v1116
    %v1245 = vpack.c.b16 %v1119, %v1118
    %v1246 = vpack.c.b16 %v1121, %v1120
    %v1247 = vpack.c.b16 %v1123, %v1122
    %v1248 = vpack.c.b16 %v1125, %v1124
    %v1249 = vpack.c.b16 %v1127, %v1126
    %v1250 = vpack.c.b16 %v1129, %v1128
    %v1251 = vpack.c.b16 %v1131, %v1130
    %v1252 = vpack.c.b16 %v1133, %v1132
    %v1253 = vpack.c.b16 %v1135, %v1134
    %v1254 = vpack.c.b16 %v1137, %v1136
    %v1255 = vpack.c.b16 %v1139, %v1138
    %v1256 = vpack.c.b16 %v1141, %v1140
    %v1257 = vpack.c.b16 %v1143, %v1142
    %v1258 = vpack.c.b16 %v1145, %v1144
    %v1259 = vpack.c.b16 %v1147, %v1146
    %v1260 = vpack.c.b16 %v1149, %v1148
    %v1261 = vpack.c.b16 %v1151, %v1150
    %v1262 = vpack.c.b16 %v1153, %v1152
    %v1263 = vpack.c.b16 %v1155, %v1154
    %v1264 = vpack.c.b16 %v1157, %v1156
    %v1265 = vpack.c.b16 %v1159, %v1158
    %v1266 = vpack.c.b16 %v1161, %v1160
    %v1267 = vpack.c.b16 %v1163, %v1162
    %v1268 = vpack.c.b16 %v1165, %v1164
    %v1269 = vpack.c.b16 %v1167, %v1166
    %v1270 = vpack.c.b16 %v1169, %v1168
    %v1271 = vpack.c.b16 %v1171, %v1170
    %v1272 = vpack.c.b16 %v1173, %v1172
    %v1273 = vpack.c.b16 %v1175, %v1174
    %v1274 = vpack.c.b16 %v1177, %v1176
    %v1275 = vpack.c.b16 %v1179, %v1178
    %v1276 = vpack.c.b16 %v1181, %v1180
    %v1277 = vpack.c.b16 %v1183, %v1182
    %v1278 = vpack.c.b16 %v1185, %v1184
    %v1279 = vpack.c.b16 %v1187, %v1186
    %v1280 = vpack.c.b16 %v1189, %v1188
    %v1281 = vpack.c.b16 %v1191, %v1190
    %v1282 = vpack.c.b16 %v1193, %v1192
    %v1283 = vpack.c.b16 %v1195, %v1194
    %v1284 = vpack.c.b16 %v1197, %v1196
    %v1285 = vpack.c.b16 %v1199, %v1198
    %v1286 = vpack.c.b16 %v1201, %v1200
    %v1287 = vpack.c.b16 %v1203, %v1202
    %v1288 = vpack.c.b16 %v1205, %v1204
    %v1289 = vpack.c.b16 %v1207, %v1206
    %v1290 = vpack.c.b16 %v1209, %v1208
    %v1291 = vpack.c.b16 %v1211, %v1210
    %v1292 = vpack.c.b16 %v1213, %v1212
    %v1293 = vpack.c.b16 %v1215, %v1214
    %v1294 = vpack.c.b16 %v1217, %v1216
    %v1295 = vpack.c.b16 %v1219, %v1218
    %v1296 = vpack.c.b16 %v1221, %v1220
    %v1297 = vpack.c.b16 %v1223, %v1222
    %v1298 = vpack.c.b16 %v1225, %v1224
    %v1299 = vpack.c.b16 %v1227, %v1226
    %v1300 = vpack.c.b16 %v1229, %v1228
    %v1301 = vpack.c.b16 %v1231, %v1230
    %v1302 = vpack.c.b16 %v1233, %v1232
    %v1303 = vpack.c.b16 %v1235, %v1234
    %v1304 = vpack.c.b16 %v1237, %v1236
    %v1305 = vpack.c.b16 %v1239, %v1238
    %v1306 = vpack.c.b16 %v1241, %v1240
    %v1307 = vpack.c.b16 %v1243, %v1242
    %1372 = vmatprep.subr.bf16.mxu0 0
    %1373 = vmatpush1.bf16.msra.mxu0 %v1251
    %1374 = vmatprep.subr.bf16.mxu0 0
    %1375 = vmatpush1.bf16.msra.mxu0 %v1250
    %1376 = vmatprep.subr.bf16.mxu0 0
    %1377 = vmatpush1.bf16.msra.mxu0 %v1249
    %1378 = vmatprep.subr.bf16.mxu0 0
    %1379 = vmatpush1.bf16.msra.mxu0 %v1248
    %1380 = vmatprep.subr.bf16.mxu0 0
    %1381 = vmatpush1.bf16.msra.mxu0 %v1247
    %1382 = vmatprep.subr.bf16.mxu0 0
    %1383 = vmatpush1.bf16.msra.mxu0 %v1246
    %1384 = vmatprep.subr.bf16.mxu0 0
    %1385 = vmatpush1.bf16.msra.mxu0 %v1245
    %1386 = vmatprep.subr.bf16.mxu0 0
    %1387 = vmatpush1.bf16.msra.mxu0 %v1244
    %1388 = vmatprep.subr.bf16.mxu0 0
    %1389 = vmatpush2.bf16.msra.mxu0 %v1259
    %1390 = vmatprep.subr.bf16.mxu0 0
    %1391 = vmatpush2.bf16.msra.mxu0 %v1258
    %1392 = vmatprep.subr.bf16.mxu0 0
    %1393 = vmatpush2.bf16.msra.mxu0 %v1257
    %1394 = vmatprep.subr.bf16.mxu0 0
    %1395 = vmatpush2.bf16.msra.mxu0 %v1256
    %1396 = vmatprep.subr.bf16.mxu0 0
    %1397 = vmatpush2.bf16.msra.mxu0 %v1255
    %1398 = vmatprep.subr.bf16.mxu0 0
    %1399 = vmatpush2.bf16.msra.mxu0 %v1254
    %1400 = vmatprep.subr.bf16.mxu0 0
    %1401 = vmatpush2.bf16.msra.mxu0 %v1253
    %1402 = vmatprep.subr.bf16.mxu0 0
    %1403 = vmatpush2.bf16.msra.mxu0 %v1252
    %1404 = vmatprep.mubr.bf16.mxu0 %v502
    %1405 = vmatmul.mubr.bf16.gmra.mxu0 %v501
    %v1406 = vpop.f32.mrf.mxu0
    %v1407 = vadd.f32 %v986, %v1406
    %v1408 = vpop.f32.mrf.mxu0
    %v1409 = vpop.f32.mrf.mxu0
    %v1410 = vpop.f32.mrf.mxu0
    %1411 = vdwg.mxu0
    %1412 = vmatprep.subr.bf16.mxu0 0
    %1413 = vmatpush1.bf16.msra.mxu0 %v1267
    %1414 = vmatprep.subr.bf16.mxu0 0
    %1415 = vmatpush1.bf16.msra.mxu0 %v1266
    %1416 = vmatprep.subr.bf16.mxu0 0
    %1417 = vmatpush1.bf16.msra.mxu0 %v1265
    %1418 = vmatprep.subr.bf16.mxu0 0
    %1419 = vmatpush1.bf16.msra.mxu0 %v1264
    %1420 = vmatprep.subr.bf16.mxu0 0
    %1421 = vmatpush1.bf16.msra.mxu0 %v1263
    %1422 = vmatprep.subr.bf16.mxu0 0
    %1423 = vmatpush1.bf16.msra.mxu0 %v1262
    %1424 = vmatprep.subr.bf16.mxu0 0
    %1425 = vmatpush1.bf16.msra.mxu0 %v1261
    %1426 = vmatprep.subr.bf16.mxu0 0
    %1427 = vmatpush1.bf16.msra.mxu0 %v1260
    %1428 = vmatprep.subr.bf16.mxu0 0
    %1429 = vmatpush2.bf16.msra.mxu0 %v1275
    %1430 = vmatprep.subr.bf16.mxu0 0
    %1431 = vmatpush2.bf16.msra.mxu0 %v1274
    %1432 = vmatprep.subr.bf16.mxu0 0
    %1433 = vmatpush2.bf16.msra.mxu0 %v1273
    %1434 = vmatprep.subr.bf16.mxu0 0
    %1435 = vmatpush2.bf16.msra.mxu0 %v1272
    %1436 = vmatprep.subr.bf16.mxu0 0
    %1437 = vmatpush2.bf16.msra.mxu0 %v1271
    %1438 = vmatprep.subr.bf16.mxu0 0
    %1439 = vmatpush2.bf16.msra.mxu0 %v1270
    %1440 = vmatprep.subr.bf16.mxu0 0
    %1441 = vmatpush2.bf16.msra.mxu0 %v1269
    %1442 = vmatprep.subr.bf16.mxu0 0
    %1443 = vmatpush2.bf16.msra.mxu0 %v1268
    %1444 = vmatprep.mubr.bf16.mxu0 %v504
    %1445 = vmatmul.mubr.bf16.gmra.mxu0 %v503
    %v1446 = vpop.f32.mrf.mxu0
    %v1447 = vadd.f32 %v1407, %v1446
    %v1448 = vpop.f32.mrf.mxu0
    %v1449 = vpop.f32.mrf.mxu0
    %v1450 = vpop.f32.mrf.mxu0
    %1451 = vdwg.mxu0
    %1452 = vmatprep.subr.bf16.mxu0 0
    %1453 = vmatpush1.bf16.msra.mxu0 %v1283
    %1454 = vmatprep.subr.bf16.mxu0 0
    %1455 = vmatpush1.bf16.msra.mxu0 %v1282
    %1456 = vmatprep.subr.bf16.mxu0 0
    %1457 = vmatpush1.bf16.msra.mxu0 %v1281
    %1458 = vmatprep.subr.bf16.mxu0 0
    %1459 = vmatpush1.bf16.msra.mxu0 %v1280
    %1460 = vmatprep.subr.bf16.mxu0 0
    %1461 = vmatpush1.bf16.msra.mxu0 %v1279
    %1462 = vmatprep.subr.bf16.mxu0 0
    %1463 = vmatpush1.bf16.msra.mxu0 %v1278
    %1464 = vmatprep.subr.bf16.mxu0 0
    %1465 = vmatpush1.bf16.msra.mxu0 %v1277
    %1466 = vmatprep.subr.bf16.mxu0 0
    %1467 = vmatpush1.bf16.msra.mxu0 %v1276
    %1468 = vmatprep.subr.bf16.mxu0 0
    %1469 = vmatpush2.bf16.msra.mxu0 %v1291
    %1470 = vmatprep.subr.bf16.mxu0 0
    %1471 = vmatpush2.bf16.msra.mxu0 %v1290
    %1472 = vmatprep.subr.bf16.mxu0 0
    %1473 = vmatpush2.bf16.msra.mxu0 %v1289
    %1474 = vmatprep.subr.bf16.mxu0 0
    %1475 = vmatpush2.bf16.msra.mxu0 %v1288
    %1476 = vmatprep.subr.bf16.mxu0 0
    %1477 = vmatpush2.bf16.msra.mxu0 %v1287
    %1478 = vmatprep.subr.bf16.mxu0 0
    %1479 = vmatpush2.bf16.msra.mxu0 %v1286
    %1480 = vmatprep.subr.bf16.mxu0 0
    %1481 = vmatpush2.bf16.msra.mxu0 %v1285
    %1482 = vmatprep.subr.bf16.mxu0 0
    %1483 = vmatpush2.bf16.msra.mxu0 %v1284
    %1484 = vmatprep.mubr.bf16.mxu0 %v506
    %1485 = vmatmul.mubr.bf16.gmra.mxu0 %v505
    %v1486 = vpop.f32.mrf.mxu0
    %v1487 = vadd.f32 %v1447, %v1486
    %v1488 = vpop.f32.mrf.mxu0
    %v1489 = vpop.f32.mrf.mxu0
    %v1490 = vpop.f32.mrf.mxu0
    %1491 = vdwg.mxu0
    %1492 = vmatprep.subr.bf16.mxu0 0
    %1493 = vmatpush1.bf16.msra.mxu0 %v1299
    %1494 = vmatprep.subr.bf16.mxu0 0
    %1495 = vmatpush1.bf16.msra.mxu0 %v1298
    %1496 = vmatprep.subr.bf16.mxu0 0
    %1497 = vmatpush1.bf16.msra.mxu0 %v1297
    %1498 = vmatprep.subr.bf16.mxu0 0
    %1499 = vmatpush1.bf16.msra.mxu0 %v1296
    %1500 = vmatprep.subr.bf16.mxu0 0
    %1501 = vmatpush1.bf16.msra.mxu0 %v1295
    %1502 = vmatprep.subr.bf16.mxu0 0
    %1503 = vmatpush1.bf16.msra.mxu0 %v1294
    %1504 = vmatprep.subr.bf16.mxu0 0
    %1505 = vmatpush1.bf16.msra.mxu0 %v1293
    %1506 = vmatprep.subr.bf16.mxu0 0
    %1507 = vmatpush1.bf16.msra.mxu0 %v1292
    %1508 = vmatprep.subr.bf16.mxu0 0
    %1509 = vmatpush2.bf16.msra.mxu0 %v1307
    %1510 = vmatprep.subr.bf16.mxu0 0
    %1511 = vmatpush2.bf16.msra.mxu0 %v1306
    %1512 = vmatprep.subr.bf16.mxu0 0
    %1513 = vmatpush2.bf16.msra.mxu0 %v1305
    %1514 = vmatprep.subr.bf16.mxu0 0
    %1515 = vmatpush2.bf16.msra.mxu0 %v1304
    %1516 = vmatprep.subr.bf16.mxu0 0
    %1517 = vmatpush2.bf16.msra.mxu0 %v1303
    %1518 = vmatprep.subr.bf16.mxu0 0
    %1519 = vmatpush2.bf16.msra.mxu0 %v1302
    %1520 = vmatprep.subr.bf16.mxu0 0
    %1521 = vmatpush2.bf16.msra.mxu0 %v1301
    %1522 = vmatprep.subr.bf16.mxu0 0
    %1523 = vmatpush2.bf16.msra.mxu0 %v1300
    %1524 = vmatprep.mubr.bf16.mxu0 %v508
    %1525 = vmatmul.mubr.bf16.gmra.mxu0 %v507
    %v1526 = vpop.f32.mrf.mxu0
    %v1527 = vadd.f32 %v1487, %v1526
    %v1528 = vpop.f32.mrf.mxu0
    %v1529 = vpop.f32.mrf.mxu0
    %v1530 = vpop.f32.mrf.mxu0
    %1531 = vdwg.mxu0
    %1532 = vst [vmem:[#allocation11] sm:$0xff] %v1527
    // Predicated region
    $region42: #{tpu_custom_call.1} parent=1 // pred_check
      _
    $region43: #{tpu_custom_call.1} parent=1 // pred_check_branch
      %1534 = sbr.rel (0) target = $region45
    $region44: #{tpu_custom_call.1} parent=1 // pred_region
      %s1536 = ssub.s32 512, 512
      %1537 = vsyncadd [#allocation4], %s1536
      %s1539 = sshll.u32 [#allocation8], 4
      %s1540 = int_to_ptr.vmem [resolvable:$true] %s1539
      %1542 = dma.vmem_to_hbm [thread:$0]  %s1540, 512, %s7, [#allocation4]
    $region45: #{tpu_custom_call.1} parent=1 // pred_fallthru
      _
    // Predicated region
    $region46: #{tpu_custom_call.1} parent=1 // pred_check
      _
    $region47: #{tpu_custom_call.1} parent=1 // pred_check_branch
      %1544 = sbr.rel (0) target = $region49
    $region48: #{tpu_custom_call.1} parent=1 // pred_region
      %s1546 = ssub.s32 128, 128
      %1547 = vsyncadd [#allocation10], %s1546
      %s1549 = sshll.u32 [#allocation9], 4
      %s1550 = int_to_ptr.vmem [resolvable:$true] %s1549
      %1552 = dma.vmem_to_hbm [thread:$0]  %s1550, 128, %s8, [#allocation10]
    $region49: #{tpu_custom_call.1} parent=1 // pred_fallthru
      _
    // Predicated region
    $region50: #{tpu_custom_call.1} parent=1 // pred_check
      _
    $region51: #{tpu_custom_call.1} parent=1 // pred_check_branch
      %1554 = sbr.rel (0) target = $region53
    $region52: #{tpu_custom_call.1} parent=1 // pred_region
      %s1556 = ssub.s32 128, 128
      %1557 = vsyncadd [#allocation10], %s1556
      %s1559 = sshll.u32 [#allocation11], 4
      %s1560 = int_to_ptr.vmem [resolvable:$true] %s1559
      %1562 = dma.vmem_to_hbm [thread:$0]  %s1560, 128, %s9, [#allocation10]
    $region53: #{tpu_custom_call.1} parent=1 // pred_fallthru
      _
    // Predicated region
    $region54: #{tpu_custom_call.1} parent=1 // pred_check
      _
    $region55: #{tpu_custom_call.1} parent=1 // pred_check_branch
      %1564 = sbr.rel (0) target = $region57
    $region56: #{tpu_custom_call.1} parent=1 // pred_region
      %1565 = dma.done [#allocation4], 512
    $region57: #{tpu_custom_call.1} parent=1 // pred_fallthru
      _
    // Predicated region
    $region58: #{tpu_custom_call.1} parent=1 // pred_check
      _
    $region59: #{tpu_custom_call.1} parent=1 // pred_check_branch
      %1567 = sbr.rel (0) target = $region61
    $region60: #{tpu_custom_call.1} parent=1 // pred_region
      %1568 = dma.done [#allocation10], 128
    $region61: #{tpu_custom_call.1} parent=1 // pred_fallthru
      _
    // Predicated region
    $region62: #{tpu_custom_call.1} parent=1 // pred_check
      _
    $region63: #{tpu_custom_call.1} parent=1 // pred_check_branch
      %1570 = sbr.rel (0) target = $region65
    $region64: #{tpu_custom_call.1} parent=1 // pred_region
      %1571 = dma.done [#allocation10], 128
    $region65: #{tpu_custom_call.1} parent=1 // pred_fallthru
      _
    %1572 = vsyncpa [#allocation3], 1
    %1573 = vsyncpa [#allocation6], 1
    %1574 = vsyncpa [#allocation4], 1
    %1575 = vsyncpa [#allocation10], 1

</llo_original>
